<compile_context>
chip_gen: v7x
topology: tpu7x:2x2x1
jax: 0.10.0
libtpu: 0.0.40
codegen_flags: <defaults>
</compile_context>

<pallas_src>
import math

import jax
import jax.numpy as jnp
from jax.experimental import pallas as pl
from jax.experimental.pallas import tpu as pltpu

BN_EPS = 1e-5        # PyTorch BatchNorm2d default eps
CLAMP_EPS = 1e-7     # epsilon used in Attention.forward
PAD_NEG = -1e30      # attention bias for padded classes (exp -> 0 exactly)


def _round_up(x, m):
    return ((x + m - 1) // m) * m


def _pick_batch_block(n, t, target_rows):
    """Largest divisor of n such that blk * t <= max(target_rows, t)."""
    best = 1
    cap = max(target_rows, t)
    for blk in range(1, n + 1):
        if n % blk == 0 and blk * t <= cap:
            best = blk
    return best


def _attention_model_kernel(
    x_ref,                # (B_blk, T, F) input block
    s0_ref, b0_ref,       # (1, F)        bn0 scale / shift
    w1_ref, b1_ref,       # (F, H), (1, H)   conv1 (BN1-folded, transposed)
    w2_ref, b2_ref,       # (H, H), (1, H)   conv2
    w3_ref, b3_ref,       # (H, H), (1, H)   conv3
    wa_ref, ba_ref,       # (H, Cp), (1, Cp) attention head (pad bias = -1e30)
    wc_ref, bc_ref,       # (H, Cp), (1, Cp) classification head
    wct_ref, bct_ref,     # (Cp, H), (Cp, 1) classification head, transposed copy
    out_ref,              # (B_blk, 1, Cp)   attention-pooled output
    sig_ref,              # (B_blk, Cp, T)   per-frame sigmoid output (transposed)
):
    B, T, _ = x_ref.shape

    # Merge the batch block into the MXU M dimension (T is a multiple of 8 so
    # this reshape is layout-free).
    x = x_ref[...].reshape(B * T, x_ref.shape[2])
    a0 = x * s0_ref[...] + b0_ref[...]                       # bn0 (eval, folded)

    def dense_relu(a, w_ref, b_ref):
        y = jnp.dot(a.astype(w_ref.dtype), w_ref[...],
                    preferred_element_type=jnp.float32) + b_ref[...]
        return jnp.maximum(y, 0.0)

    a1 = dense_relu(a0, w1_ref, b1_ref)
    a2 = dense_relu(a1, w2_ref, b2_ref)
    emb = dense_relu(a2, w3_ref, b3_ref)                     # (B*T, H) f32
    emb_c = emb.astype(w1_ref.dtype)

    # Attention head; softmax over the (padded) class axis.  Padded classes
    # carry a -1e30 bias so exp() underflows to 0 and the softmax over the real
    # classes is unaffected.
    att_logit = (jnp.dot(emb_c, wa_ref[...], preferred_element_type=jnp.float32)
                 + ba_ref[...])
    att_logit = att_logit - jnp.max(att_logit, axis=-1, keepdims=True)
    att_exp = jnp.exp(att_logit)
    att = att_exp * pl.reciprocal(
        jnp.sum(att_exp, axis=-1, keepdims=True), approx=True)
    att = jnp.clip(att, CLAMP_EPS, 1.0 - CLAMP_EPS)          # (B*T, Cp)

    # Classification head in natural (rows = time) orientation, for pooling.
    cla = jax.nn.sigmoid(
        jnp.dot(emb_c, wc_ref[...], preferred_element_type=jnp.float32)
        + bc_ref[...])                                       # (B*T, Cp)

    wct = wct_ref[...]
    bct = bct_ref[...]
    for b in range(B):                                       # static, unrolled
        lo = b * T
        att_b = att[lo:lo + T, :]                            # (T, Cp)
        cla_b = cla[lo:lo + T, :]                            # (T, Cp)
        inv_t = pl.reciprocal(jnp.sum(att_b, axis=0, keepdims=True), approx=True)
        out_ref[b] = jnp.sum(att_b * inv_t * cla_b, axis=0, keepdims=True)

        # sig written already transposed ((Cp, T) per sample) via an MXU "NT"
        # matmul -- trades a little spare MXU work for zero transposes.
        cla_t = jax.lax.dot_general(
            wct, emb_c[lo:lo + T, :],
            dimension_numbers=(((1,), (1,)), ((), ())),
            preferred_element_type=jnp.float32)              # (Cp, T)
        sig_ref[b] = jax.nn.sigmoid(cla_t + bct)


def decision_level_single_attention(x, params, *, target_rows=256):
    """x: (N, T, F) float32.  Returns (output (N, C), sig (N, C, T))."""
    N, T, F = x.shape
    H = params["w1"].shape[1]
    Cp = params["wa"].shape[1]
    C = params["classes_num"]

    B_blk = _pick_batch_block(N, T, target_rows)
    grid = (N // B_blk,)

    weight_args = [
        params["s0"], params["b0"],
        params["w1"], params["b1"],
        params["w2"], params["b2"],
        params["w3"], params["b3"],
        params["wa"], params["ba"],
        params["wc"], params["bc"],
        params["wct"], params["bct"],
    ]

    def const_spec(arr):
        r = arr.ndim
        return pl.BlockSpec(arr.shape, lambda n, _r=r: (0,) * _r)

    in_specs = [pl.BlockSpec((B_blk, T, F), lambda n: (n, 0, 0))]
    in_specs += [const_spec(a) for a in weight_args]

    out_specs = [
        pl.BlockSpec((B_blk, 1, Cp), lambda n: (n, 0, 0)),
        pl.BlockSpec((B_blk, Cp, T), lambda n: (n, 0, 0)),
    ]
    out_shape = (
        jax.ShapeDtypeStruct((N, 1, Cp), jnp.float32),
        jax.ShapeDtypeStruct((N, Cp, T), jnp.float32),
    )

    # Rough VMEM budget (double-buffered blocks + weights), with headroom;
    # explicitly sized so v7x's 64 MiB VMEM is respected at larger shapes.
    blk_bytes = 2 * math.prod((B_blk, T, F)) * 4
    blk_bytes += 2 * math.prod((B_blk, 1, Cp)) * 4
    blk_bytes += 2 * math.prod((B_blk, Cp, T)) * 4
    blk_bytes += sum(2 * int(a.size) * a.dtype.itemsize for a in weight_args)
    vmem_limit = int(min(max(blk_bytes + (8 << 20), 32 << 20), 48 << 20))

    weight_bytes = sum(int(a.size) * a.dtype.itemsize for a in weight_args)
    cost = pl.CostEstimate(
        flops=int(2 * N * T * (F * H + 2 * H * H + 3 * H * Cp)),
        transcendentals=int(3 * N * T * Cp),
        bytes_accessed=int(x.size * 4 + grid[0] * weight_bytes
                           + N * Cp * 4 + N * Cp * T * 4),
    )

    out_p, sig_p = pl.pallas_call(
        _attention_model_kernel,
        out_shape=out_shape,
        grid_spec=pltpu.PrefetchScalarGridSpec(
            num_scalar_prefetch=0,
            grid=grid,
            in_specs=in_specs,
            out_specs=out_specs,
        ),
        compiler_params=pltpu.CompilerParams(
            dimension_semantics=("parallel",),
            vmem_limit_bytes=vmem_limit,
        ),
        cost_estimate=cost,
    )(x, *weight_args)

    # Only cheap slices here (no transpose of the big array): sig already comes
    # out of the kernel in (N, C_pad, T) orientation.
    return out_p[:, 0, :C], sig_p[:, :C, :]


def make_params(key, freq_bins, hidden_units, classes_num,
                weights_dtype=jnp.float32):
    """Deterministic init mirroring init_layer / init_bn (eval-mode BN).

    Returns (kernel_params, reference_params).  Kernel params have BN folded
    into the conv weights, transposed to x @ W form, and the class dimension
    padded to a lane-dense multiple of 128.
    """
    c_pad = _round_up(classes_num, 128)

    def conv_init(k, n_out, n_in):
        n = n_in  # 1x1 kernels -> n = n_in * 1 * 1
        std = math.sqrt(2.0 / n)
        scale = std * math.sqrt(3.0)
        return jax.random.uniform(k, (n_out, n_in), jnp.float32, -scale, scale)

    k1, k2, k3, ka, kc = jax.random.split(key, 5)
    W1 = conv_init(k1, hidden_units, freq_bins)
    W2 = conv_init(k2, hidden_units, hidden_units)
    W3 = conv_init(k3, hidden_units, hidden_units)
    Wa = conv_init(ka, classes_num, hidden_units)
    Wc = conv_init(kc, classes_num, hidden_units)
    ba = jnp.zeros((classes_num,), jnp.float32)   # init_layer zeroes the bias
    bc = jnp.zeros((classes_num,), jnp.float32)

    # BatchNorm2d eval mode with init_bn: gamma=1, beta=0, mean=0, var=1
    def bn_scale_shift(dim):
        gamma = jnp.ones((dim,), jnp.float32)
        beta = jnp.zeros((dim,), jnp.float32)
        mean = jnp.zeros((dim,), jnp.float32)
        var = jnp.ones((dim,), jnp.float32)
        s = gamma / jnp.sqrt(var + BN_EPS)
        return s, beta - mean * s

    s0, sh0 = bn_scale_shift(freq_bins)
    s1, sh1 = bn_scale_shift(hidden_units)
    s2, sh2 = bn_scale_shift(hidden_units)
    s3, sh3 = bn_scale_shift(hidden_units)

    # Fold BN into transposed conv weights: bn(x @ Wᵀ) = x @ (s⊙W)ᵀ + shift
    w1 = (W1 * s1[:, None]).T
    w2 = (W2 * s2[:, None]).T
    w3 = (W3 * s3[:, None]).T

    def pad_cols(w):  # (H, C) -> (H, C_pad), zero columns for pad classes
        return jnp.pad(w, ((0, 0), (0, c_pad - classes_num)))

    wa_p = pad_cols(Wa.T)
    wc_p = pad_cols(Wc.T)
    ba_p = jnp.full((1, c_pad), PAD_NEG, jnp.float32).at[:, :classes_num].set(ba)
    bc_p = jnp.pad(bc, (0, c_pad - classes_num)).reshape(1, c_pad)

    params = {
        "classes_num": classes_num,
        "s0": s0.reshape(1, -1), "b0": sh0.reshape(1, -1),
        "w1": w1.astype(weights_dtype), "b1": sh1.reshape(1, -1),
        "w2": w2.astype(weights_dtype), "b2": sh2.reshape(1, -1),
        "w3": w3.astype(weights_dtype), "b3": sh3.reshape(1, -1),
        "wa": wa_p.astype(weights_dtype), "ba": ba_p,
        "wc": wc_p.astype(weights_dtype), "bc": bc_p,
        "wct": wc_p.T.astype(weights_dtype),      # (C_pad, H)
        "bct": bc_p.reshape(c_pad, 1),            # (C_pad, 1)
    }

    ref = {
        "s0": s0.reshape(1, -1), "b0": sh0.reshape(1, -1),
        "w1": w1, "b1": sh1.reshape(1, -1),
        "w2": w2, "b2": sh2.reshape(1, -1),
        "w3": w3, "b3": sh3.reshape(1, -1),
        "wa": Wa.T, "ba": ba.reshape(1, -1),
        "wc": Wc.T, "bc": bc.reshape(1, -1),
    }
    return params, ref


def reference_forward(x, ref):
    """Pure-JAX reference (same math as the PyTorch eval forward, unpadded)."""
    a0 = x * ref["s0"] + ref["b0"]
    a1 = jax.nn.relu(a0 @ ref["w1"] + ref["b1"])
    a2 = jax.nn.relu(a1 @ ref["w2"] + ref["b2"])
    emb = jax.nn.relu(a2 @ ref["w3"] + ref["b3"])
    att = jax.nn.softmax(emb @ ref["wa"] + ref["ba"], axis=-1)
    cla = jax.nn.sigmoid(emb @ ref["wc"] + ref["bc"])
    att = jnp.clip(att, CLAMP_EPS, 1.0 - CLAMP_EPS)
    norm_att = att / jnp.sum(att, axis=1, keepdims=True)
    out = jnp.sum(norm_att * cla, axis=1)
    return out, jnp.transpose(cla, (0, 2, 1))


if __name__ == "__main__":
    # Small shapes consistent with the module: (batch, time_steps, freq_bins)
    N, T, FREQ, HIDDEN, CLASSES = 4, 16, 16, 32, 8

    key = jax.random.PRNGKey(0)
    k_x, k_p = jax.random.split(key)
    x = jax.random.normal(k_x, (N, T, FREQ), dtype=jnp.float32)

    ref_out = ref_sig = None

    # --- float32 weights; small target_rows forces a 2-step batch-blocked grid
    params_f32, ref = make_params(k_p, FREQ, HIDDEN, CLASSES,
                                  weights_dtype=jnp.float32)
    out_f32, sig_f32 = decision_level_single_attention(x, params_f32,
                                                       target_rows=32)
    out_f32 = jax.block_until_ready(out_f32)
    sig_f32 = jax.block_until_ready(sig_f32)

    ref_out, ref_sig = reference_forward(x, ref)
    assert out_f32.shape == (N, CLASSES)
    assert sig_f32.shape == (N, CLASSES, T)
    assert jnp.allclose(out_f32, ref_out, atol=2e-3, rtol=2e-3)
    assert jnp.allclose(sig_f32, ref_sig, atol=2e-3, rtol=2e-3)

    # --- bf16 weights (v6e/v7x fast path); default target_rows -> 1 grid step
    params_bf16, _ = make_params(k_p, FREQ, HIDDEN, CLASSES,
                                 weights_dtype=jnp.bfloat16)
    out_b16, sig_b16 = decision_level_single_attention(x, params_bf16)
    out_b16 = jax.block_until_ready(out_b16)
    sig_b16 = jax.block_until_ready(sig_b16)
    assert jnp.allclose(out_b16, ref_out, atol=2e-2, rtol=2e-2)
    assert jnp.allclose(sig_b16, ref_sig, atol=2e-2, rtol=2e-2)

    print("KERNEL_OK")
</pallas_src>

<mosaic_0001>
module attributes {stable_mosaic.version = 11 : i64} {
  func.func @_attention_model_kernel(%arg0: i32, %arg1: memref<2x16x16xf32, #tpu.memory_space<vmem>>, %arg2: memref<1x16xf32, #tpu.memory_space<vmem>>, %arg3: memref<1x16xf32, #tpu.memory_space<vmem>>, %arg4: memref<16x32xf32, #tpu.memory_space<vmem>>, %arg5: memref<1x32xf32, #tpu.memory_space<vmem>>, %arg6: memref<32x32xf32, #tpu.memory_space<vmem>>, %arg7: memref<1x32xf32, #tpu.memory_space<vmem>>, %arg8: memref<32x32xf32, #tpu.memory_space<vmem>>, %arg9: memref<1x32xf32, #tpu.memory_space<vmem>>, %arg10: memref<32x128xf32, #tpu.memory_space<vmem>>, %arg11: memref<1x128xf32, #tpu.memory_space<vmem>>, %arg12: memref<32x128xf32, #tpu.memory_space<vmem>>, %arg13: memref<1x128xf32, #tpu.memory_space<vmem>>, %arg14: memref<128x32xf32, #tpu.memory_space<vmem>>, %arg15: memref<128x1xf32, #tpu.memory_space<vmem>>, %arg16: memref<2x1x128xf32, #tpu.memory_space<vmem>>, %arg17: memref<2x128x16xf32, #tpu.memory_space<vmem>>) attributes {dimension_semantics = [#tpu.dimension_semantics<parallel>], iteration_bounds = array<i64: 2>, scalar_prefetch = 0 : i64, scratch_operands = 0 : i64, tpu.core_type = #tpu.core_type<tc>, window_params = [{transform_indices = @transform_0, window_bounds = array<i64: 2, 16, 16>}, {pipeline_mode = #tpu.pipeline_mode<synchronous>, transform_indices = @transform_1, window_bounds = array<i64: 1, 16>}, {pipeline_mode = #tpu.pipeline_mode<synchronous>, transform_indices = @transform_2, window_bounds = array<i64: 1, 16>}, {pipeline_mode = #tpu.pipeline_mode<synchronous>, transform_indices = @transform_3, window_bounds = array<i64: 16, 32>}, {pipeline_mode = #tpu.pipeline_mode<synchronous>, transform_indices = @transform_4, window_bounds = array<i64: 1, 32>}, {pipeline_mode = #tpu.pipeline_mode<synchronous>, transform_indices = @transform_5, window_bounds = array<i64: 32, 32>}, {pipeline_mode = #tpu.pipeline_mode<synchronous>, transform_indices = @transform_6, window_bounds = array<i64: 1, 32>}, {pipeline_mode = #tpu.pipeline_mode<synchronous>, transform_indices = @transform_7, window_bounds = array<i64: 32, 32>}, {pipeline_mode = #tpu.pipeline_mode<synchronous>, transform_indices = @transform_8, window_bounds = array<i64: 1, 32>}, {pipeline_mode = #tpu.pipeline_mode<synchronous>, transform_indices = @transform_9, window_bounds = array<i64: 32, 128>}, {pipeline_mode = #tpu.pipeline_mode<synchronous>, transform_indices = @transform_10, window_bounds = array<i64: 1, 128>}, {pipeline_mode = #tpu.pipeline_mode<synchronous>, transform_indices = @transform_11, window_bounds = array<i64: 32, 128>}, {pipeline_mode = #tpu.pipeline_mode<synchronous>, transform_indices = @transform_12, window_bounds = array<i64: 1, 128>}, {pipeline_mode = #tpu.pipeline_mode<synchronous>, transform_indices = @transform_13, window_bounds = array<i64: 128, 32>}, {pipeline_mode = #tpu.pipeline_mode<synchronous>, transform_indices = @transform_14, window_bounds = array<i64: 128, 1>}, {transform_indices = @transform_15, window_bounds = array<i64: 2, 1, 128>}, {transform_indices = @transform_16, window_bounds = array<i64: 2, 128, 16>}]} {
    %c0 = arith.constant 0 : index
    %c0_0 = arith.constant 0 : index
    %c0_1 = arith.constant 0 : index
    %0 = vector.load %arg1[%c0, %c0_0, %c0_1] : memref<2x16x16xf32, #tpu.memory_space<vmem>>, vector<2x16x16xf32>
    %1 = vector.shape_cast %0 : vector<2x16x16xf32> to vector<32x16xf32>
    %c0_2 = arith.constant 0 : index
    %c0_3 = arith.constant 0 : index
    %2 = vector.load %arg2[%c0_2, %c0_3] : memref<1x16xf32, #tpu.memory_space<vmem>>, vector<1x16xf32>
    %3 = vector.broadcast %2 : vector<1x16xf32> to vector<32x16xf32>
    %4 = arith.mulf %1, %3 : vector<32x16xf32>
    %c0_4 = arith.constant 0 : index
    %c0_5 = arith.constant 0 : index
    %5 = vector.load %arg3[%c0_4, %c0_5] : memref<1x16xf32, #tpu.memory_space<vmem>>, vector<1x16xf32>
    %6 = vector.broadcast %5 : vector<1x16xf32> to vector<32x16xf32>
    %7 = arith.addf %4, %6 : vector<32x16xf32>
    %c0_6 = arith.constant 0 : index
    %c0_7 = arith.constant 0 : index
    %8 = vector.load %arg4[%c0_6, %c0_7] : memref<16x32xf32, #tpu.memory_space<vmem>>, vector<16x32xf32>
    %cst = arith.constant dense<0.000000e+00> : vector<32x32xf32>
    %9 = tpu.matmul %7, %8, %cst {dimension_numbers = #tpu.dot_dimension_numbers<[1], [0], [0], [1], [0, 0, 1, 1], [], []>} : vector<32x16xf32>, vector<16x32xf32>, vector<32x32xf32> -> vector<32x32xf32>
    %c0_8 = arith.constant 0 : index
    %c0_9 = arith.constant 0 : index
    %10 = vector.load %arg5[%c0_8, %c0_9] : memref<1x32xf32, #tpu.memory_space<vmem>>, vector<1x32xf32>
    %11 = vector.broadcast %10 : vector<1x32xf32> to vector<32x32xf32>
    %12 = arith.addf %9, %11 : vector<32x32xf32>
    %cst_10 = arith.constant 0.000000e+00 : f32
    %13 = vector.broadcast %cst_10 : f32 to vector<32x32xf32>
    %14 = arith.maximumf %12, %13 : vector<32x32xf32>
    %c0_11 = arith.constant 0 : index
    %c0_12 = arith.constant 0 : index
    %15 = vector.load %arg6[%c0_11, %c0_12] : memref<32x32xf32, #tpu.memory_space<vmem>>, vector<32x32xf32>
    %cst_13 = arith.constant dense<0.000000e+00> : vector<32x32xf32>
    %16 = tpu.matmul %14, %15, %cst_13 {dimension_numbers = #tpu.dot_dimension_numbers<[1], [0], [0], [1], [0, 0, 1, 1], [], []>} : vector<32x32xf32>, vector<32x32xf32>, vector<32x32xf32> -> vector<32x32xf32>
    %c0_14 = arith.constant 0 : index
    %c0_15 = arith.constant 0 : index
    %17 = vector.load %arg7[%c0_14, %c0_15] : memref<1x32xf32, #tpu.memory_space<vmem>>, vector<1x32xf32>
    %18 = vector.broadcast %17 : vector<1x32xf32> to vector<32x32xf32>
    %19 = arith.addf %16, %18 : vector<32x32xf32>
    %cst_16 = arith.constant 0.000000e+00 : f32
    %20 = vector.broadcast %cst_16 : f32 to vector<32x32xf32>
    %21 = arith.maximumf %19, %20 : vector<32x32xf32>
    %c0_17 = arith.constant 0 : index
    %c0_18 = arith.constant 0 : index
    %22 = vector.load %arg8[%c0_17, %c0_18] : memref<32x32xf32, #tpu.memory_space<vmem>>, vector<32x32xf32>
    %cst_19 = arith.constant dense<0.000000e+00> : vector<32x32xf32>
    %23 = tpu.matmul %21, %22, %cst_19 {dimension_numbers = #tpu.dot_dimension_numbers<[1], [0], [0], [1], [0, 0, 1, 1], [], []>} : vector<32x32xf32>, vector<32x32xf32>, vector<32x32xf32> -> vector<32x32xf32>
    %c0_20 = arith.constant 0 : index
    %c0_21 = arith.constant 0 : index
    %24 = vector.load %arg9[%c0_20, %c0_21] : memref<1x32xf32, #tpu.memory_space<vmem>>, vector<1x32xf32>
    %25 = vector.broadcast %24 : vector<1x32xf32> to vector<32x32xf32>
    %26 = arith.addf %23, %25 : vector<32x32xf32>
    %cst_22 = arith.constant 0.000000e+00 : f32
    %27 = vector.broadcast %cst_22 : f32 to vector<32x32xf32>
    %28 = arith.maximumf %26, %27 : vector<32x32xf32>
    %c0_23 = arith.constant 0 : index
    %c0_24 = arith.constant 0 : index
    %29 = vector.load %arg10[%c0_23, %c0_24] : memref<32x128xf32, #tpu.memory_space<vmem>>, vector<32x128xf32>
    %cst_25 = arith.constant dense<0.000000e+00> : vector<32x128xf32>
    %30 = tpu.matmul %28, %29, %cst_25 {dimension_numbers = #tpu.dot_dimension_numbers<[1], [0], [0], [1], [0, 0, 1, 1], [], []>} : vector<32x32xf32>, vector<32x128xf32>, vector<32x128xf32> -> vector<32x128xf32>
    %c0_26 = arith.constant 0 : index
    %c0_27 = arith.constant 0 : index
    %31 = vector.load %arg11[%c0_26, %c0_27] : memref<1x128xf32, #tpu.memory_space<vmem>>, vector<1x128xf32>
    %32 = vector.broadcast %31 : vector<1x128xf32> to vector<32x128xf32>
    %33 = arith.addf %30, %32 : vector<32x128xf32>
    %cst_28 = arith.constant dense<0xFF800000> : vector<32xf32>
    %34 = vector.multi_reduction <maximumf>, %33, %cst_28 [1] : vector<32x128xf32> to vector<32xf32>
    %35 = vector.shape_cast %34 : vector<32xf32> to vector<32x1xf32>
    %36 = vector.broadcast %35 : vector<32x1xf32> to vector<32x128xf32>
    %37 = arith.subf %33, %36 : vector<32x128xf32>
    %38 = math.exp %37 : vector<32x128xf32>
    %cst_29 = arith.constant dense<0.000000e+00> : vector<32xf32>
    %39 = vector.multi_reduction <add>, %38, %cst_29 [1] : vector<32x128xf32> to vector<32xf32>
    %40 = vector.shape_cast %39 : vector<32xf32> to vector<32x1xf32>
    %41 = tpu.reciprocal %40 {approx = true} : vector<32x1xf32> -> vector<32x1xf32>
    %42 = vector.broadcast %41 : vector<32x1xf32> to vector<32x128xf32>
    %43 = arith.mulf %38, %42 : vector<32x128xf32>
    %cst_30 = arith.constant 1.000000e-07 : f32
    %cst_31 = arith.constant 0.99999988 : f32
    %44 = vector.broadcast %cst_30 : f32 to vector<32x128xf32>
    %45 = arith.maximumf %44, %43 : vector<32x128xf32>
    %46 = vector.broadcast %cst_31 : f32 to vector<32x128xf32>
    %47 = arith.minimumf %46, %45 : vector<32x128xf32>
    %c0_32 = arith.constant 0 : index
    %c0_33 = arith.constant 0 : index
    %48 = vector.load %arg12[%c0_32, %c0_33] : memref<32x128xf32, #tpu.memory_space<vmem>>, vector<32x128xf32>
    %cst_34 = arith.constant dense<0.000000e+00> : vector<32x128xf32>
    %49 = tpu.matmul %28, %48, %cst_34 {dimension_numbers = #tpu.dot_dimension_numbers<[1], [0], [0], [1], [0, 0, 1, 1], [], []>} : vector<32x32xf32>, vector<32x128xf32>, vector<32x128xf32> -> vector<32x128xf32>
    %c0_35 = arith.constant 0 : index
    %c0_36 = arith.constant 0 : index
    %50 = vector.load %arg13[%c0_35, %c0_36] : memref<1x128xf32, #tpu.memory_space<vmem>>, vector<1x128xf32>
    %51 = vector.broadcast %50 : vector<1x128xf32> to vector<32x128xf32>
    %52 = arith.addf %49, %51 : vector<32x128xf32>
    %53 = arith.negf %52 : vector<32x128xf32>
    %54 = math.exp %53 : vector<32x128xf32>
    %cst_37 = arith.constant 1.000000e+00 : f32
    %55 = vector.broadcast %cst_37 : f32 to vector<32x128xf32>
    %56 = arith.addf %55, %54 : vector<32x128xf32>
    %57 = arith.divf %55, %56 : vector<32x128xf32>
    %c0_38 = arith.constant 0 : index
    %c0_39 = arith.constant 0 : index
    %58 = vector.load %arg14[%c0_38, %c0_39] : memref<128x32xf32, #tpu.memory_space<vmem>>, vector<128x32xf32>
    %c0_40 = arith.constant 0 : index
    %c0_41 = arith.constant 0 : index
    %59 = vector.load %arg15[%c0_40, %c0_41] : memref<128x1xf32, #tpu.memory_space<vmem>>, vector<128x1xf32>
    %60 = vector.extract_strided_slice %47 {offsets = [0, 0], sizes = [16, 128], strides = [1, 1]} : vector<32x128xf32> to vector<16x128xf32>
    %61 = vector.extract_strided_slice %57 {offsets = [0, 0], sizes = [16, 128], strides = [1, 1]} : vector<32x128xf32> to vector<16x128xf32>
    %cst_42 = arith.constant dense<0.000000e+00> : vector<128xf32>
    %62 = vector.multi_reduction <add>, %60, %cst_42 [0] : vector<16x128xf32> to vector<128xf32>
    %63 = vector.shape_cast %62 : vector<128xf32> to vector<1x128xf32>
    %64 = tpu.reciprocal %63 {approx = true} : vector<1x128xf32> -> vector<1x128xf32>
    %65 = vector.broadcast %64 : vector<1x128xf32> to vector<16x128xf32>
    %66 = arith.mulf %60, %65 : vector<16x128xf32>
    %67 = arith.mulf %66, %61 : vector<16x128xf32>
    %cst_43 = arith.constant dense<0.000000e+00> : vector<128xf32>
    %68 = vector.multi_reduction <add>, %67, %cst_43 [0] : vector<16x128xf32> to vector<128xf32>
    %69 = vector.shape_cast %68 : vector<128xf32> to vector<1x128xf32>
    %c0_44 = arith.constant 0 : index
    %c0_45 = arith.constant 0 : index
    %c0_46 = arith.constant 0 : index
    %70 = vector.load %arg16[%c0_44, %c0_45, %c0_46] : memref<2x1x128xf32, #tpu.memory_space<vmem>>, vector<1x1x128xf32>
    %71 = vector.shape_cast %70 : vector<1x1x128xf32> to vector<1x128xf32>
    %72 = vector.shape_cast %69 : vector<1x128xf32> to vector<1x1x128xf32>
    tpu.vector_store %arg16[%c0_44, %c0_45, %c0_46], %72 {strides = array<i32>} : memref<2x1x128xf32, #tpu.memory_space<vmem>>, vector<1x1x128xf32>,
    %73 = vector.extract_strided_slice %28 {offsets = [0, 0], sizes = [16, 32], strides = [1, 1]} : vector<32x32xf32> to vector<16x32xf32>
    %cst_47 = arith.constant dense<0.000000e+00> : vector<128x16xf32>
    %74 = tpu.matmul %58, %73, %cst_47 {dimension_numbers = #tpu.dot_dimension_numbers<[1], [1], [0], [0], [0, 0, 1, 0], [], []>} : vector<128x32xf32>, vector<16x32xf32>, vector<128x16xf32> -> vector<128x16xf32>
    %75 = vector.broadcast %59 : vector<128x1xf32> to vector<128x16xf32>
    %76 = arith.addf %74, %75 : vector<128x16xf32>
    %77 = arith.negf %76 : vector<128x16xf32>
    %78 = math.exp %77 : vector<128x16xf32>
    %cst_48 = arith.constant 1.000000e+00 : f32
    %79 = vector.broadcast %cst_48 : f32 to vector<128x16xf32>
    %80 = arith.addf %79, %78 : vector<128x16xf32>
    %81 = arith.divf %79, %80 : vector<128x16xf32>
    %c0_49 = arith.constant 0 : index
    %c0_50 = arith.constant 0 : index
    %c0_51 = arith.constant 0 : index
    %82 = vector.load %arg17[%c0_49, %c0_50, %c0_51] : memref<2x128x16xf32, #tpu.memory_space<vmem>>, vector<1x128x16xf32>
    %83 = vector.shape_cast %82 : vector<1x128x16xf32> to vector<128x16xf32>
    %84 = vector.shape_cast %81 : vector<128x16xf32> to vector<1x128x16xf32>
    tpu.vector_store %arg17[%c0_49, %c0_50, %c0_51], %84 {strides = array<i32>} : memref<2x128x16xf32, #tpu.memory_space<vmem>>, vector<1x128x16xf32>,
    %85 = vector.extract_strided_slice %47 {offsets = [16, 0], sizes = [16, 128], strides = [1, 1]} : vector<32x128xf32> to vector<16x128xf32>
    %86 = vector.extract_strided_slice %57 {offsets = [16, 0], sizes = [16, 128], strides = [1, 1]} : vector<32x128xf32> to vector<16x128xf32>
    %cst_52 = arith.constant dense<0.000000e+00> : vector<128xf32>
    %87 = vector.multi_reduction <add>, %85, %cst_52 [0] : vector<16x128xf32> to vector<128xf32>
    %88 = vector.shape_cast %87 : vector<128xf32> to vector<1x128xf32>
    %89 = tpu.reciprocal %88 {approx = true} : vector<1x128xf32> -> vector<1x128xf32>
    %90 = vector.broadcast %89 : vector<1x128xf32> to vector<16x128xf32>
    %91 = arith.mulf %85, %90 : vector<16x128xf32>
    %92 = arith.mulf %91, %86 : vector<16x128xf32>
    %cst_53 = arith.constant dense<0.000000e+00> : vector<128xf32>
    %93 = vector.multi_reduction <add>, %92, %cst_53 [0] : vector<16x128xf32> to vector<128xf32>
    %94 = vector.shape_cast %93 : vector<128xf32> to vector<1x128xf32>
    %c1 = arith.constant 1 : index
    %c0_54 = arith.constant 0 : index
    %c0_55 = arith.constant 0 : index
    %95 = vector.load %arg16[%c1, %c0_54, %c0_55] : memref<2x1x128xf32, #tpu.memory_space<vmem>>, vector<1x1x128xf32>
    %96 = vector.shape_cast %95 : vector<1x1x128xf32> to vector<1x128xf32>
    %97 = vector.shape_cast %94 : vector<1x128xf32> to vector<1x1x128xf32>
    tpu.vector_store %arg16[%c1, %c0_54, %c0_55], %97 {strides = array<i32>} : memref<2x1x128xf32, #tpu.memory_space<vmem>>, vector<1x1x128xf32>,
    %98 = vector.extract_strided_slice %28 {offsets = [16, 0], sizes = [16, 32], strides = [1, 1]} : vector<32x32xf32> to vector<16x32xf32>
    %cst_56 = arith.constant dense<0.000000e+00> : vector<128x16xf32>
    %99 = tpu.matmul %58, %98, %cst_56 {dimension_numbers = #tpu.dot_dimension_numbers<[1], [1], [0], [0], [0, 0, 1, 0], [], []>} : vector<128x32xf32>, vector<16x32xf32>, vector<128x16xf32> -> vector<128x16xf32>
    %100 = vector.broadcast %59 : vector<128x1xf32> to vector<128x16xf32>
    %101 = arith.addf %99, %100 : vector<128x16xf32>
    %102 = arith.negf %101 : vector<128x16xf32>
    %103 = math.exp %102 : vector<128x16xf32>
    %cst_57 = arith.constant 1.000000e+00 : f32
    %104 = vector.broadcast %cst_57 : f32 to vector<128x16xf32>
    %105 = arith.addf %104, %103 : vector<128x16xf32>
    %106 = arith.divf %104, %105 : vector<128x16xf32>
    %c1_58 = arith.constant 1 : index
    %c0_59 = arith.constant 0 : index
    %c0_60 = arith.constant 0 : index
    %107 = vector.load %arg17[%c1_58, %c0_59, %c0_60] : memref<2x128x16xf32, #tpu.memory_space<vmem>>, vector<1x128x16xf32>
    %108 = vector.shape_cast %107 : vector<1x128x16xf32> to vector<128x16xf32>
    %109 = vector.shape_cast %106 : vector<128x16xf32> to vector<1x128x16xf32>
    tpu.vector_store %arg17[%c1_58, %c0_59, %c0_60], %109 {strides = array<i32>} : memref<2x128x16xf32, #tpu.memory_space<vmem>>, vector<1x128x16xf32>,
    return
  }
  func.func @transform_0(%arg0: i32) -> (i32, i32, i32) {
    %c0_i32 = arith.constant 0 : i32
    %c0_i32_0 = arith.constant 0 : i32
    %c0_i32_1 = arith.constant 0 : i32
    return %arg0, %c0_i32, %c0_i32_0 : i32, i32, i32
  }
  func.func @transform_1(%arg0: i32) -> (i32, i32) {
    %c0_i32 = arith.constant 0 : i32
    %c0_i32_0 = arith.constant 0 : i32
    %c0_i32_1 = arith.constant 0 : i32
    return %c0_i32, %c0_i32_0 : i32, i32
  }
  func.func @transform_2(%arg0: i32) -> (i32, i32) {
    %c0_i32 = arith.constant 0 : i32
    %c0_i32_0 = arith.constant 0 : i32
    %c0_i32_1 = arith.constant 0 : i32
    return %c0_i32, %c0_i32_0 : i32, i32
  }
  func.func @transform_3(%arg0: i32) -> (i32, i32) {
    %c0_i32 = arith.constant 0 : i32
    %c0_i32_0 = arith.constant 0 : i32
    %c0_i32_1 = arith.constant 0 : i32
    return %c0_i32, %c0_i32_0 : i32, i32
  }
  func.func @transform_4(%arg0: i32) -> (i32, i32) {
    %c0_i32 = arith.constant 0 : i32
    %c0_i32_0 = arith.constant 0 : i32
    %c0_i32_1 = arith.constant 0 : i32
    return %c0_i32, %c0_i32_0 : i32, i32
  }
  func.func @transform_5(%arg0: i32) -> (i32, i32) {
    %c0_i32 = arith.constant 0 : i32
    %c0_i32_0 = arith.constant 0 : i32
    %c0_i32_1 = arith.constant 0 : i32
    return %c0_i32, %c0_i32_0 : i32, i32
  }
  func.func @transform_6(%arg0: i32) -> (i32, i32) {
    %c0_i32 = arith.constant 0 : i32
    %c0_i32_0 = arith.constant 0 : i32
    %c0_i32_1 = arith.constant 0 : i32
    return %c0_i32, %c0_i32_0 : i32, i32
  }
  func.func @transform_7(%arg0: i32) -> (i32, i32) {
    %c0_i32 = arith.constant 0 : i32
    %c0_i32_0 = arith.constant 0 : i32
    %c0_i32_1 = arith.constant 0 : i32
    return %c0_i32, %c0_i32_0 : i32, i32
  }
  func.func @transform_8(%arg0: i32) -> (i32, i32) {
    %c0_i32 = arith.constant 0 : i32
    %c0_i32_0 = arith.constant 0 : i32
    %c0_i32_1 = arith.constant 0 : i32
    return %c0_i32, %c0_i32_0 : i32, i32
  }
  func.func @transform_9(%arg0: i32) -> (i32, i32) {
    %c0_i32 = arith.constant 0 : i32
    %c0_i32_0 = arith.constant 0 : i32
    %c0_i32_1 = arith.constant 0 : i32
    return %c0_i32, %c0_i32_0 : i32, i32
  }
  func.func @transform_10(%arg0: i32) -> (i32, i32) {
    %c0_i32 = arith.constant 0 : i32
    %c0_i32_0 = arith.constant 0 : i32
    %c0_i32_1 = arith.constant 0 : i32
    return %c0_i32, %c0_i32_0 : i32, i32
  }
  func.func @transform_11(%arg0: i32) -> (i32, i32) {
    %c0_i32 = arith.constant 0 : i32
    %c0_i32_0 = arith.constant 0 : i32
    %c0_i32_1 = arith.constant 0 : i32
    return %c0_i32, %c0_i32_0 : i32, i32
  }
  func.func @transform_12(%arg0: i32) -> (i32, i32) {
    %c0_i32 = arith.constant 0 : i32
    %c0_i32_0 = arith.constant 0 : i32
    %c0_i32_1 = arith.constant 0 : i32
    return %c0_i32, %c0_i32_0 : i32, i32
  }
  func.func @transform_13(%arg0: i32) -> (i32, i32) {
    %c0_i32 = arith.constant 0 : i32
    %c0_i32_0 = arith.constant 0 : i32
    %c0_i32_1 = arith.constant 0 : i32
    return %c0_i32, %c0_i32_0 : i32, i32
  }
  func.func @transform_14(%arg0: i32) -> (i32, i32) {
    %c0_i32 = arith.constant 0 : i32
    %c0_i32_0 = arith.constant 0 : i32
    %c0_i32_1 = arith.constant 0 : i32
    return %c0_i32, %c0_i32_0 : i32, i32
  }
  func.func @transform_15(%arg0: i32) -> (i32, i32, i32) {
    %c0_i32 = arith.constant 0 : i32
    %c0_i32_0 = arith.constant 0 : i32
    %c0_i32_1 = arith.constant 0 : i32
    return %arg0, %c0_i32, %c0_i32_0 : i32, i32, i32
  }
  func.func @transform_16(%arg0: i32) -> (i32, i32, i32) {
    %c0_i32 = arith.constant 0 : i32
    %c0_i32_0 = arith.constant 0 : i32
    %c0_i32_1 = arith.constant 0 : i32
    return %arg0, %c0_i32, %c0_i32_0 : i32, i32, i32
  }
}

</mosaic_0001>

<llo_original>
// kernel: tpu_custom_call.1
$region0: #{tpu_custom_call.1}
  #allocation0 [shape = 'u32[]', space=smem, size = 0x4, offset = 0x4, fixed_abs, tag = 'smem constant byte address 0x4 - core index']
  #allocation1 [shape = 'u32[144,128]{1,0:T(1,128)}', space=vmem, size = 0x12000, scoped, tag = 'internal scratch']
  %s0 = inlined_call_operand.vmem [shape: f32[4,16,16], index: 0, kind: input, shape index: {}]
  %s1 = inlined_call_operand.vmem [shape: f32[1,16], index: 1, kind: input, shape index: {}]
  %s2 = inlined_call_operand.vmem [shape: f32[1,16], index: 2, kind: input, shape index: {}]
  %s3 = inlined_call_operand.vmem [shape: f32[16,32], index: 3, kind: input, shape index: {}]
  %s4 = inlined_call_operand.vmem [shape: f32[1,32], index: 4, kind: input, shape index: {}]
  %s5 = inlined_call_operand.vmem [shape: f32[32,32], index: 5, kind: input, shape index: {}]
  %s6 = inlined_call_operand.vmem [shape: f32[1,32], index: 6, kind: input, shape index: {}]
  %s7 = inlined_call_operand.vmem [shape: f32[32,32], index: 7, kind: input, shape index: {}]
  %s8 = inlined_call_operand.vmem [shape: f32[1,32], index: 8, kind: input, shape index: {}]
  %s9 = inlined_call_operand.vmem [shape: f32[32,128], index: 9, kind: input, shape index: {}]
  %s10 = inlined_call_operand.vmem [shape: f32[1,128], index: 10, kind: input, shape index: {}]
  %s11 = inlined_call_operand.vmem [shape: f32[32,128], index: 11, kind: input, shape index: {}]
  %s12 = inlined_call_operand.vmem [shape: f32[1,128], index: 12, kind: input, shape index: {}]
  %s13 = inlined_call_operand.vmem [shape: f32[128,32], index: 13, kind: input, shape index: {}]
  %s14 = inlined_call_operand.vmem [shape: f32[128,1], index: 14, kind: input, shape index: {}]
  %s15 = inlined_call_operand.hbm [shape: f32[4,1,128], index: 15, kind: output, shape index: {0}]
  %s16 = inlined_call_operand.vmem [shape: f32[4,128,16], index: 16, kind: output, shape index: {1}]
  %17 = xla_tuple %s15, %s16
  %s18 = sld [smem:[#allocation0]]
  $region101: #{tpu_custom_call.1} parent=0
    _
  %s20 = ssub.s32 1, %s18
  %s21 = scalar_select 0, %s20, %s18
  $region1: #{tpu_custom_call.1} parent=0
    #allocation2 [shape = 'u8[2048]{0}', space=vmem, size = 0x800, scoped, tag = 'output window, operand 0']
    #allocation3 [shape = 's32[2]{0}', space=sflag, size = 0x8, scoped, tag = 'scoped memory for tpu_custom_call.1']
    %22 = vsyncpa [#allocation3], 0
    %s23 = scalar_lea.sflag [#allocation3], 1
    %24 = vsyncpa %s23, 0
    loop: start=0, step=1, limit=4
    $region2: #{tpu_custom_call.1} parent=1 // loop_pre_header
      _
    $region3: #{tpu_custom_call.1} parent=1 // loop_header
      %s26 = sphi 0, %s30
      %p27 = scmp.ge.s32.totalorder %s26, 4
      %s36 = sphi 0, %s38
      %s39 = sphi 0, %s36
      %s40 = sphi 0, %s39
      %s56 = sphi 0, %s40
      %s60 = sphi 0, %s60
      %s62 = sphi 0, %s60
      %s63 = sphi 0, %s62
      %s77 = sphi 0, %s63
      %s81 = sphi 0, %s81
      %s83 = sphi 0, %s81
      %s84 = sphi 0, %s83
      %s98 = sphi 0, %s84
      %s102 = sphi 0, %s102
      %s104 = sphi 0, %s102
      %s105 = sphi 0, %s104
      %s119 = sphi 0, %s105
      %s123 = sphi 0, %s123
      %s125 = sphi 0, %s123
      %s126 = sphi 0, %s125
      %s140 = sphi 0, %s126
      %s144 = sphi 0, %s144
      %s146 = sphi 0, %s144
      %s147 = sphi 0, %s146
      %s161 = sphi 0, %s147
      %s165 = sphi 0, %s165
      %s167 = sphi 0, %s165
      %s168 = sphi 0, %s167
      %s182 = sphi 0, %s168
      %s186 = sphi 0, %s186
      %s188 = sphi 0, %s186
      %s189 = sphi 0, %s188
      %s203 = sphi 0, %s189
      %s207 = sphi 0, %s207
      %s209 = sphi 0, %s207
      %s210 = sphi 0, %s209
      %s224 = sphi 0, %s210
      %s228 = sphi 0, %s228
      %s230 = sphi 0, %s228
      %s231 = sphi 0, %s230
      %s245 = sphi 0, %s231
      %s249 = sphi 0, %s249
      %s251 = sphi 0, %s249
      %s252 = sphi 0, %s251
      %s266 = sphi 0, %s252
      %s270 = sphi 0, %s270
      %s272 = sphi 0, %s270
      %s273 = sphi 0, %s272
      %s287 = sphi 0, %s273
      %s291 = sphi 0, %s291
      %s293 = sphi 0, %s291
      %s294 = sphi 0, %s293
      %s308 = sphi 0, %s294
      %s312 = sphi 0, %s312
      %s314 = sphi 0, %s312
      %s315 = sphi 0, %s314
      %s329 = sphi 0, %s315
      %s333 = sphi 0, %s333
      %s335 = sphi 0, %s333
      %s336 = sphi 0, %s335
      %s350 = sphi 0, %s336
      %s356 = sphi 0, %s358
      %s359 = sphi 0, %s356
      %s360 = sphi 0, %s359
      %s376 = sphi 0, %s360
      %s382 = sphi 0, %s384
      %s385 = sphi 0, %s382
      %s386 = sphi 0, %s385
      %s402 = sphi 0, %s386
    $region4: #{tpu_custom_call.1} parent=1 // loop_header_branch
      %29 = sbr.rel (%p27) target = $region8
    $region5: #{tpu_custom_call.1} parent=1 // loop_body
      %s31 = ssub.s32 %s26, 1
      %s32 = ssub.s32 %s26, 2
      %s33 = sadd.s32 %s26, 1
      %s34 = ssub.s32 %s26, %s33
      %p35 = scmp.eq.s32.totalorder %s34, 0
      %s37 = sadd.s32 %s36, 1
      %s38 = scalar_select %p35, %s36, %s37
      %p41 = pneg %p35
      %p42 = scmp.eq.s32.totalorder %s26, 1
      %p43 = por %p41, %p42
      %p44 = scmp.ne.s32.totalorder %s36, %s39
      %p45 = scmp.eq.s32.totalorder %s26, 0
      %p46 = por %p44, %p45
      %p47 = scmp.ne.s32.totalorder %s36, %s39
      %p48 = scmp.eq.s32.totalorder %s31, 1
      %p49 = por %p47, %p48
      %p50 = scmp.ne.s32.totalorder %s39, %s40
      %p51 = scmp.eq.s32.totalorder %s31, 0
      %p52 = por %p50, %p51
      %p53 = scmp.ne.s32.totalorder %s39, %s40
      %p54 = scmp.eq.s32.totalorder %s32, 1
      %p55 = por %p53, %p54
      %p57 = scmp.ne.s32.totalorder %s40, %s56
      %p58 = scmp.eq.s32.totalorder %s32, 0
      %p59 = por %p57, %p58
      %s61 = sadd.s32 %s60, 1
      %p64 = scmp.eq.s32.totalorder %s26, 1
      %p65 = scmp.ne.s32.totalorder %s60, %s62
      %p66 = scmp.eq.s32.totalorder %s26, 0
      %p67 = por %p65, %p66
      %p68 = scmp.ne.s32.totalorder %s60, %s62
      %p69 = scmp.eq.s32.totalorder %s31, 1
      %p70 = por %p68, %p69
      %p71 = scmp.ne.s32.totalorder %s62, %s63
      %p72 = scmp.eq.s32.totalorder %s31, 0
      %p73 = por %p71, %p72
      %p74 = scmp.ne.s32.totalorder %s62, %s63
      %p75 = scmp.eq.s32.totalorder %s32, 1
      %p76 = por %p74, %p75
      %p78 = scmp.ne.s32.totalorder %s63, %s77
      %p79 = scmp.eq.s32.totalorder %s32, 0
      %p80 = por %p78, %p79
      %s82 = sadd.s32 %s81, 1
      %p85 = scmp.eq.s32.totalorder %s26, 1
      %p86 = scmp.ne.s32.totalorder %s81, %s83
      %p87 = scmp.eq.s32.totalorder %s26, 0
      %p88 = por %p86, %p87
      %p89 = scmp.ne.s32.totalorder %s81, %s83
      %p90 = scmp.eq.s32.totalorder %s31, 1
      %p91 = por %p89, %p90
      %p92 = scmp.ne.s32.totalorder %s83, %s84
      %p93 = scmp.eq.s32.totalorder %s31, 0
      %p94 = por %p92, %p93
      %p95 = scmp.ne.s32.totalorder %s83, %s84
      %p96 = scmp.eq.s32.totalorder %s32, 1
      %p97 = por %p95, %p96
      %p99 = scmp.ne.s32.totalorder %s84, %s98
      %p100 = scmp.eq.s32.totalorder %s32, 0
      %p101 = por %p99, %p100
      %s103 = sadd.s32 %s102, 1
      %p106 = scmp.eq.s32.totalorder %s26, 1
      %p107 = scmp.ne.s32.totalorder %s102, %s104
      %p108 = scmp.eq.s32.totalorder %s26, 0
      %p109 = por %p107, %p108
      %p110 = scmp.ne.s32.totalorder %s102, %s104
      %p111 = scmp.eq.s32.totalorder %s31, 1
      %p112 = por %p110, %p111
      %p113 = scmp.ne.s32.totalorder %s104, %s105
      %p114 = scmp.eq.s32.totalorder %s31, 0
      %p115 = por %p113, %p114
      %p116 = scmp.ne.s32.totalorder %s104, %s105
      %p117 = scmp.eq.s32.totalorder %s32, 1
      %p118 = por %p116, %p117
      %p120 = scmp.ne.s32.totalorder %s105, %s119
      %p121 = scmp.eq.s32.totalorder %s32, 0
      %p122 = por %p120, %p121
      %s124 = sadd.s32 %s123, 1
      %p127 = scmp.eq.s32.totalorder %s26, 1
      %p128 = scmp.ne.s32.totalorder %s123, %s125
      %p129 = scmp.eq.s32.totalorder %s26, 0
      %p130 = por %p128, %p129
      %p131 = scmp.ne.s32.totalorder %s123, %s125
      %p132 = scmp.eq.s32.totalorder %s31, 1
      %p133 = por %p131, %p132
      %p134 = scmp.ne.s32.totalorder %s125, %s126
      %p135 = scmp.eq.s32.totalorder %s31, 0
      %p136 = por %p134, %p135
      %p137 = scmp.ne.s32.totalorder %s125, %s126
      %p138 = scmp.eq.s32.totalorder %s32, 1
      %p139 = por %p137, %p138
      %p141 = scmp.ne.s32.totalorder %s126, %s140
      %p142 = scmp.eq.s32.totalorder %s32, 0
      %p143 = por %p141, %p142
      %s145 = sadd.s32 %s144, 1
      %p148 = scmp.eq.s32.totalorder %s26, 1
      %p149 = scmp.ne.s32.totalorder %s144, %s146
      %p150 = scmp.eq.s32.totalorder %s26, 0
      %p151 = por %p149, %p150
      %p152 = scmp.ne.s32.totalorder %s144, %s146
      %p153 = scmp.eq.s32.totalorder %s31, 1
      %p154 = por %p152, %p153
      %p155 = scmp.ne.s32.totalorder %s146, %s147
      %p156 = scmp.eq.s32.totalorder %s31, 0
      %p157 = por %p155, %p156
      %p158 = scmp.ne.s32.totalorder %s146, %s147
      %p159 = scmp.eq.s32.totalorder %s32, 1
      %p160 = por %p158, %p159
      %p162 = scmp.ne.s32.totalorder %s147, %s161
      %p163 = scmp.eq.s32.totalorder %s32, 0
      %p164 = por %p162, %p163
      %s166 = sadd.s32 %s165, 1
      %p169 = scmp.eq.s32.totalorder %s26, 1
      %p170 = scmp.ne.s32.totalorder %s165, %s167
      %p171 = scmp.eq.s32.totalorder %s26, 0
      %p172 = por %p170, %p171
      %p173 = scmp.ne.s32.totalorder %s165, %s167
      %p174 = scmp.eq.s32.totalorder %s31, 1
      %p175 = por %p173, %p174
      %p176 = scmp.ne.s32.totalorder %s167, %s168
      %p177 = scmp.eq.s32.totalorder %s31, 0
      %p178 = por %p176, %p177
      %p179 = scmp.ne.s32.totalorder %s167, %s168
      %p180 = scmp.eq.s32.totalorder %s32, 1
      %p181 = por %p179, %p180
      %p183 = scmp.ne.s32.totalorder %s168, %s182
      %p184 = scmp.eq.s32.totalorder %s32, 0
      %p185 = por %p183, %p184
      %s187 = sadd.s32 %s186, 1
      %p190 = scmp.eq.s32.totalorder %s26, 1
      %p191 = scmp.ne.s32.totalorder %s186, %s188
      %p192 = scmp.eq.s32.totalorder %s26, 0
      %p193 = por %p191, %p192
      %p194 = scmp.ne.s32.totalorder %s186, %s188
      %p195 = scmp.eq.s32.totalorder %s31, 1
      %p196 = por %p194, %p195
      %p197 = scmp.ne.s32.totalorder %s188, %s189
      %p198 = scmp.eq.s32.totalorder %s31, 0
      %p199 = por %p197, %p198
      %p200 = scmp.ne.s32.totalorder %s188, %s189
      %p201 = scmp.eq.s32.totalorder %s32, 1
      %p202 = por %p200, %p201
      %p204 = scmp.ne.s32.totalorder %s189, %s203
      %p205 = scmp.eq.s32.totalorder %s32, 0
      %p206 = por %p204, %p205
      %s208 = sadd.s32 %s207, 1
      %p211 = scmp.eq.s32.totalorder %s26, 1
      %p212 = scmp.ne.s32.totalorder %s207, %s209
      %p213 = scmp.eq.s32.totalorder %s26, 0
      %p214 = por %p212, %p213
      %p215 = scmp.ne.s32.totalorder %s207, %s209
      %p216 = scmp.eq.s32.totalorder %s31, 1
      %p217 = por %p215, %p216
      %p218 = scmp.ne.s32.totalorder %s209, %s210
      %p219 = scmp.eq.s32.totalorder %s31, 0
      %p220 = por %p218, %p219
      %p221 = scmp.ne.s32.totalorder %s209, %s210
      %p222 = scmp.eq.s32.totalorder %s32, 1
      %p223 = por %p221, %p222
      %p225 = scmp.ne.s32.totalorder %s210, %s224
      %p226 = scmp.eq.s32.totalorder %s32, 0
      %p227 = por %p225, %p226
      %s229 = sadd.s32 %s228, 1
      %p232 = scmp.eq.s32.totalorder %s26, 1
      %p233 = scmp.ne.s32.totalorder %s228, %s230
      %p234 = scmp.eq.s32.totalorder %s26, 0
      %p235 = por %p233, %p234
      %p236 = scmp.ne.s32.totalorder %s228, %s230
      %p237 = scmp.eq.s32.totalorder %s31, 1
      %p238 = por %p236, %p237
      %p239 = scmp.ne.s32.totalorder %s230, %s231
      %p240 = scmp.eq.s32.totalorder %s31, 0
      %p241 = por %p239, %p240
      %p242 = scmp.ne.s32.totalorder %s230, %s231
      %p243 = scmp.eq.s32.totalorder %s32, 1
      %p244 = por %p242, %p243
      %p246 = scmp.ne.s32.totalorder %s231, %s245
      %p247 = scmp.eq.s32.totalorder %s32, 0
      %p248 = por %p246, %p247
      %s250 = sadd.s32 %s249, 1
      %p253 = scmp.eq.s32.totalorder %s26, 1
      %p254 = scmp.ne.s32.totalorder %s249, %s251
      %p255 = scmp.eq.s32.totalorder %s26, 0
      %p256 = por %p254, %p255
      %p257 = scmp.ne.s32.totalorder %s249, %s251
      %p258 = scmp.eq.s32.totalorder %s31, 1
      %p259 = por %p257, %p258
      %p260 = scmp.ne.s32.totalorder %s251, %s252
      %p261 = scmp.eq.s32.totalorder %s31, 0
      %p262 = por %p260, %p261
      %p263 = scmp.ne.s32.totalorder %s251, %s252
      %p264 = scmp.eq.s32.totalorder %s32, 1
      %p265 = por %p263, %p264
      %p267 = scmp.ne.s32.totalorder %s252, %s266
      %p268 = scmp.eq.s32.totalorder %s32, 0
      %p269 = por %p267, %p268
      %s271 = sadd.s32 %s270, 1
      %p274 = scmp.eq.s32.totalorder %s26, 1
      %p275 = scmp.ne.s32.totalorder %s270, %s272
      %p276 = scmp.eq.s32.totalorder %s26, 0
      %p277 = por %p275, %p276
      %p278 = scmp.ne.s32.totalorder %s270, %s272
      %p279 = scmp.eq.s32.totalorder %s31, 1
      %p280 = por %p278, %p279
      %p281 = scmp.ne.s32.totalorder %s272, %s273
      %p282 = scmp.eq.s32.totalorder %s31, 0
      %p283 = por %p281, %p282
      %p284 = scmp.ne.s32.totalorder %s272, %s273
      %p285 = scmp.eq.s32.totalorder %s32, 1
      %p286 = por %p284, %p285
      %p288 = scmp.ne.s32.totalorder %s273, %s287
      %p289 = scmp.eq.s32.totalorder %s32, 0
      %p290 = por %p288, %p289
      %s292 = sadd.s32 %s291, 1
      %p295 = scmp.eq.s32.totalorder %s26, 1
      %p296 = scmp.ne.s32.totalorder %s291, %s293
      %p297 = scmp.eq.s32.totalorder %s26, 0
      %p298 = por %p296, %p297
      %p299 = scmp.ne.s32.totalorder %s291, %s293
      %p300 = scmp.eq.s32.totalorder %s31, 1
      %p301 = por %p299, %p300
      %p302 = scmp.ne.s32.totalorder %s293, %s294
      %p303 = scmp.eq.s32.totalorder %s31, 0
      %p304 = por %p302, %p303
      %p305 = scmp.ne.s32.totalorder %s293, %s294
      %p306 = scmp.eq.s32.totalorder %s32, 1
      %p307 = por %p305, %p306
      %p309 = scmp.ne.s32.totalorder %s294, %s308
      %p310 = scmp.eq.s32.totalorder %s32, 0
      %p311 = por %p309, %p310
      %s313 = sadd.s32 %s312, 1
      %p316 = scmp.eq.s32.totalorder %s26, 1
      %p317 = scmp.ne.s32.totalorder %s312, %s314
      %p318 = scmp.eq.s32.totalorder %s26, 0
      %p319 = por %p317, %p318
      %p320 = scmp.ne.s32.totalorder %s312, %s314
      %p321 = scmp.eq.s32.totalorder %s31, 1
      %p322 = por %p320, %p321
      %p323 = scmp.ne.s32.totalorder %s314, %s315
      %p324 = scmp.eq.s32.totalorder %s31, 0
      %p325 = por %p323, %p324
      %p326 = scmp.ne.s32.totalorder %s314, %s315
      %p327 = scmp.eq.s32.totalorder %s32, 1
      %p328 = por %p326, %p327
      %p330 = scmp.ne.s32.totalorder %s315, %s329
      %p331 = scmp.eq.s32.totalorder %s32, 0
      %p332 = por %p330, %p331
      %s334 = sadd.s32 %s333, 1
      %p337 = scmp.eq.s32.totalorder %s26, 1
      %p338 = scmp.ne.s32.totalorder %s333, %s335
      %p339 = scmp.eq.s32.totalorder %s26, 0
      %p340 = por %p338, %p339
      %p341 = scmp.ne.s32.totalorder %s333, %s335
      %p342 = scmp.eq.s32.totalorder %s31, 1
      %p343 = por %p341, %p342
      %p344 = scmp.ne.s32.totalorder %s335, %s336
      %p345 = scmp.eq.s32.totalorder %s31, 0
      %p346 = por %p344, %p345
      %p347 = scmp.ne.s32.totalorder %s335, %s336
      %p348 = scmp.eq.s32.totalorder %s32, 1
      %p349 = por %p347, %p348
      %p351 = scmp.ne.s32.totalorder %s336, %s350
      %p352 = scmp.eq.s32.totalorder %s32, 0
      %p353 = por %p351, %p352
      %s354 = ssub.s32 %s26, %s33
      %p355 = scmp.eq.s32.totalorder %s354, 0
      %s357 = sadd.s32 %s356, 1
      %s358 = scalar_select %p355, %s356, %s357
      %p361 = pneg %p355
      %p362 = scmp.eq.s32.totalorder %s26, 1
      %p363 = por %p361, %p362
      %p364 = scmp.ne.s32.totalorder %s356, %s359
      %p365 = scmp.eq.s32.totalorder %s26, 0
      %p366 = por %p364, %p365
      %p367 = scmp.ne.s32.totalorder %s356, %s359
      %p368 = scmp.eq.s32.totalorder %s31, 1
      %p369 = por %p367, %p368
      %p370 = scmp.ne.s32.totalorder %s359, %s360
      %p371 = scmp.eq.s32.totalorder %s31, 0
      %p372 = por %p370, %p371
      %p373 = scmp.ne.s32.totalorder %s359, %s360
      %p374 = scmp.eq.s32.totalorder %s32, 1
      %p375 = por %p373, %p374
      %p377 = scmp.ne.s32.totalorder %s360, %s376
      %p378 = scmp.eq.s32.totalorder %s32, 0
      %p379 = por %p377, %p378
      %s380 = ssub.s32 %s26, %s33
      %p381 = scmp.eq.s32.totalorder %s380, 0
      %s383 = sadd.s32 %s382, 1
      %s384 = scalar_select %p381, %s382, %s383
      %p387 = pneg %p381
      %p388 = scmp.eq.s32.totalorder %s26, 1
      %p389 = por %p387, %p388
      %p390 = scmp.ne.s32.totalorder %s382, %s385
      %p391 = scmp.eq.s32.totalorder %s26, 0
      %p392 = por %p390, %p391
      %p393 = scmp.ne.s32.totalorder %s382, %s385
      %p394 = scmp.eq.s32.totalorder %s31, 1
      %p395 = por %p393, %p394
      %p396 = scmp.ne.s32.totalorder %s385, %s386
      %p397 = scmp.eq.s32.totalorder %s31, 0
      %p398 = por %p396, %p397
      %p399 = scmp.ne.s32.totalorder %s385, %s386
      %p400 = scmp.eq.s32.totalorder %s32, 1
      %p401 = por %p399, %p400
      %p403 = scmp.ne.s32.totalorder %s386, %s402
      %p404 = scmp.eq.s32.totalorder %s32, 0
      %p405 = por %p403, %p404
      %p406 = scmp.le.s32.totalorder 1, %s26
      %p407 = scmp.lt.s32.totalorder %s26, 3
      %p408 = pnand %p406, %p407
      %p409 = pneg %p408
      // Predicated region
      $region9: #{tpu_custom_call.1} parent=5 // pred_check
        _
      $region10: #{tpu_custom_call.1} parent=5 // pred_check_branch
        %411 = sbr.rel (%p408) target = $region12
      $region11: #{tpu_custom_call.1} parent=5 // pred_region
        %s412 = ssub.s32 %s26, 1
        // Predicated region
        $region13: #{tpu_custom_call.1} parent=11 // pred_check
          %p413 = pneg %p73
        $region14: #{tpu_custom_call.1} parent=11 // pred_check_branch
          %415 = sbr.rel (%p413) target = $region16
        $region15: #{tpu_custom_call.1} parent=11 // pred_region
          _
        $region16: #{tpu_custom_call.1} parent=11 // pred_fallthru
          _
        // Predicated region
        $region17: #{tpu_custom_call.1} parent=11 // pred_check
          %p416 = pneg %p94
        $region18: #{tpu_custom_call.1} parent=11 // pred_check_branch
          %418 = sbr.rel (%p416) target = $region20
        $region19: #{tpu_custom_call.1} parent=11 // pred_region
          _
        $region20: #{tpu_custom_call.1} parent=11 // pred_fallthru
          _
        // Predicated region
        $region21: #{tpu_custom_call.1} parent=11 // pred_check
          %p419 = pneg %p115
        $region22: #{tpu_custom_call.1} parent=11 // pred_check_branch
          %421 = sbr.rel (%p419) target = $region24
        $region23: #{tpu_custom_call.1} parent=11 // pred_region
          _
        $region24: #{tpu_custom_call.1} parent=11 // pred_fallthru
          _
        // Predicated region
        $region25: #{tpu_custom_call.1} parent=11 // pred_check
          %p422 = pneg %p136
        $region26: #{tpu_custom_call.1} parent=11 // pred_check_branch
          %424 = sbr.rel (%p422) target = $region28
        $region27: #{tpu_custom_call.1} parent=11 // pred_region
          _
        $region28: #{tpu_custom_call.1} parent=11 // pred_fallthru
          _
        // Predicated region
        $region29: #{tpu_custom_call.1} parent=11 // pred_check
          %p425 = pneg %p157
        $region30: #{tpu_custom_call.1} parent=11 // pred_check_branch
          %427 = sbr.rel (%p425) target = $region32
        $region31: #{tpu_custom_call.1} parent=11 // pred_region
          _
        $region32: #{tpu_custom_call.1} parent=11 // pred_fallthru
          _
        // Predicated region
        $region33: #{tpu_custom_call.1} parent=11 // pred_check
          %p428 = pneg %p178
        $region34: #{tpu_custom_call.1} parent=11 // pred_check_branch
          %430 = sbr.rel (%p428) target = $region36
        $region35: #{tpu_custom_call.1} parent=11 // pred_region
          _
        $region36: #{tpu_custom_call.1} parent=11 // pred_fallthru
          _
        // Predicated region
        $region37: #{tpu_custom_call.1} parent=11 // pred_check
          %p431 = pneg %p199
        $region38: #{tpu_custom_call.1} parent=11 // pred_check_branch
          %433 = sbr.rel (%p431) target = $region40
        $region39: #{tpu_custom_call.1} parent=11 // pred_region
          _
        $region40: #{tpu_custom_call.1} parent=11 // pred_fallthru
          _
        // Predicated region
        $region41: #{tpu_custom_call.1} parent=11 // pred_check
          %p434 = pneg %p220
        $region42: #{tpu_custom_call.1} parent=11 // pred_check_branch
          %436 = sbr.rel (%p434) target = $region44
        $region43: #{tpu_custom_call.1} parent=11 // pred_region
          _
        $region44: #{tpu_custom_call.1} parent=11 // pred_fallthru
          _
        // Predicated region
        $region45: #{tpu_custom_call.1} parent=11 // pred_check
          %p437 = pneg %p241
        $region46: #{tpu_custom_call.1} parent=11 // pred_check_branch
          %439 = sbr.rel (%p437) target = $region48
        $region47: #{tpu_custom_call.1} parent=11 // pred_region
          _
        $region48: #{tpu_custom_call.1} parent=11 // pred_fallthru
          _
        // Predicated region
        $region49: #{tpu_custom_call.1} parent=11 // pred_check
          %p440 = pneg %p262
        $region50: #{tpu_custom_call.1} parent=11 // pred_check_branch
          %442 = sbr.rel (%p440) target = $region52
        $region51: #{tpu_custom_call.1} parent=11 // pred_region
          _
        $region52: #{tpu_custom_call.1} parent=11 // pred_fallthru
          _
        // Predicated region
        $region53: #{tpu_custom_call.1} parent=11 // pred_check
          %p443 = pneg %p283
        $region54: #{tpu_custom_call.1} parent=11 // pred_check_branch
          %445 = sbr.rel (%p443) target = $region56
        $region55: #{tpu_custom_call.1} parent=11 // pred_region
          _
        $region56: #{tpu_custom_call.1} parent=11 // pred_fallthru
          _
        // Predicated region
        $region57: #{tpu_custom_call.1} parent=11 // pred_check
          %p446 = pneg %p304
        $region58: #{tpu_custom_call.1} parent=11 // pred_check_branch
          %448 = sbr.rel (%p446) target = $region60
        $region59: #{tpu_custom_call.1} parent=11 // pred_region
          _
        $region60: #{tpu_custom_call.1} parent=11 // pred_fallthru
          _
        // Predicated region
        $region61: #{tpu_custom_call.1} parent=11 // pred_check
          %p449 = pneg %p325
        $region62: #{tpu_custom_call.1} parent=11 // pred_check_branch
          %451 = sbr.rel (%p449) target = $region64
        $region63: #{tpu_custom_call.1} parent=11 // pred_region
          _
        $region64: #{tpu_custom_call.1} parent=11 // pred_fallthru
          _
        // Predicated region
        $region65: #{tpu_custom_call.1} parent=11 // pred_check
          %p452 = pneg %p346
        $region66: #{tpu_custom_call.1} parent=11 // pred_check_branch
          %454 = sbr.rel (%p452) target = $region68
        $region67: #{tpu_custom_call.1} parent=11 // pred_region
          _
        $region68: #{tpu_custom_call.1} parent=11 // pred_fallthru
          _
      $region12: #{tpu_custom_call.1} parent=5 // pred_fallthru
        _
      %p455 = scmp.lt.s32.totalorder %s26, 2
      // Predicated region
      $region69: #{tpu_custom_call.1} parent=5 // pred_check
        %p456 = pneg %p455
      $region70: #{tpu_custom_call.1} parent=5 // pred_check_branch
        %458 = sbr.rel (%p456) target = $region72
      $region71: #{tpu_custom_call.1} parent=5 // pred_region
        // Predicated region
        $region73: #{tpu_custom_call.1} parent=71 // pred_check
          %p459 = pneg %p46
        $region74: #{tpu_custom_call.1} parent=71 // pred_check_branch
          %461 = sbr.rel (%p459) target = $region76
        $region75: #{tpu_custom_call.1} parent=71 // pred_region
          %s462 = smul.u32 2, %s26
          %p463 = scmp.lt.s32.totalorder %s462, 3
          %s464 = scalar_select %p463, %s462, 3
          %s465 = smul.addr %s464, 2
          %s466 = smul.addr %s465, 8
          %s467 = scalar_lea.vmem %s0, %s466
          %s468 = smul.u32 2, %s26
        $region76: #{tpu_custom_call.1} parent=71 // pred_fallthru
          _
      $region72: #{tpu_custom_call.1} parent=5 // pred_fallthru
        _
      %p469 = scmp.le.s32.totalorder 1, %s26
      %p470 = scmp.lt.s32.totalorder %s26, 3
      %p471 = pnand %p469, %p470
      %p472 = pneg %p471
      // Predicated region
      $region77: #{tpu_custom_call.1} parent=5 // pred_check
        _
      $region78: #{tpu_custom_call.1} parent=5 // pred_check_branch
        %474 = sbr.rel (%p471) target = $region80
      $region79: #{tpu_custom_call.1} parent=5 // pred_region
        %s475 = ssub.s32 %s26, 1
        %s476 = smul.u32 2, %s31
        %p477 = scmp.lt.s32.totalorder %s476, 3
        %s478 = scalar_select %p477, %s476, 3
        %s479 = smul.addr %s478, 2
        %s480 = smul.addr %s479, 8
        %s481 = scalar_lea.vmem %s0, %s480
        %p482 = pneg %p52
        %p483 = pneg %p49
        %p484 = pneg %p73
        %p485 = pneg %p70
        %p486 = pneg %p94
        %p487 = pneg %p91
        %p488 = pneg %p115
        %p489 = pneg %p112
        %p490 = pneg %p136
        %p491 = pneg %p133
        %p492 = pneg %p157
        %p493 = pneg %p154
        %p494 = pneg %p178
        %p495 = pneg %p175
        %p496 = pneg %p199
        %p497 = pneg %p196
        %p498 = pneg %p220
        %p499 = pneg %p217
        %p500 = pneg %p241
        %p501 = pneg %p238
        %p502 = pneg %p262
        %p503 = pneg %p259
        %p504 = pneg %p283
        %p505 = pneg %p280
        %p506 = pneg %p304
        %p507 = pneg %p301
        %p508 = pneg %p325
        %p509 = pneg %p322
        %p510 = pneg %p346
        %p511 = pneg %p343
        %p512 = pneg %p372
        %p513 = pneg %p369
        %s514 = sand.u32 %s359, 1
        %s515 = scalar_lea.sflag [#allocation3], %s514
        %s516 = sand.u32 %s359, 1
        %s517 = smul.addr %s516, 2
        %s518 = scalar_lea.vmem [#allocation2], %s517
        %p519 = pneg %p398
        %p520 = pneg %p395
        %s521 = smul.u32 2, %s31
        %p522 = scmp.lt.s32.totalorder %s521, 3
        %s523 = scalar_select %p522, %s521, 3
        %s524 = smul.addr %s523, 16
        %s525 = smul.addr %s524, 8
        %s526 = scalar_lea.vmem %s16, %s525
        %s527 = smul.u32 2, %s31
        %p528 = scmp.lt.s32.totalorder %s527, 3
        %s529 = scalar_select %p528, %s527, 3
        %s530 = smul.addr %s529, 2
        %s531 = smul.addr %s530, 8
        %s532 = scalar_lea.vmem %s0, %s531
        %s533 = smul.u32 2, %s31
        %s534 = smul.u32 2, %s31
        %s535 = smul.u32 2, %s31
        %p536 = scmp.lt.s32.totalorder %s535, 3
        %s537 = scalar_select %p536, %s535, 3
        %s538 = smul.addr %s537, 16
        %s539 = smul.addr %s538, 8
        %s540 = scalar_lea.vmem %s16, %s539
        %s541 = smul.u32 2, %s31
        %v542 = vld [vmem:[%s532] sm:$0xff]
        %v543 = vld [vmem:[%s532 + $0x8] sm:$0xff]
        %v544 = vld [vmem:[%s532 + $0x10] sm:$0xff]
        %v545 = vld [vmem:[%s532 + $0x18] sm:$0xff]
        %v546 = vld [vmem:[%s1] sm:$0x1]
        %v548 = vlaneseq
        %v549 = vshrl.u32 %v548, 7
        %v550 = vsub.s32 0, %v549
        %v551 = vrot.slane %v546, %v550
        %v553 = vmul.f32 %v542, %v551
        %v554 = vmul.f32 %v543, %v551
        %v555 = vmul.f32 %v544, %v551
        %v556 = vmul.f32 %v545, %v551
        %v557 = vld [vmem:[%s2] sm:$0x1]
        %v559 = vlaneseq
        %v560 = vshrl.u32 %v559, 7
        %v561 = vsub.s32 0, %v560
        %v562 = vrot.slane %v557, %v561
        %v564 = vadd.f32 %v553, %v562
        %v565 = vadd.f32 %v554, %v562
        %v566 = vadd.f32 %v555, %v562
        %v567 = vadd.f32 %v556, %v562
        %v568 = vld [vmem:[%s3] sm:$0xff]
        %v569 = vld [vmem:[%s3 + $0x8] sm:$0xff]
        %v570 = vld [vmem:[%s4] sm:$0x1]
        %v572 = vlaneseq
        %v573 = vshrl.u32 %v572, 7
        %v574 = vsub.s32 0, %v573
        %v575 = vrot.slane %v570, %v574
        %vm577 = vcmask 130048
        %v579 = vsel %vm577, %v564, 0
        %v582 = vsel %vm577, %v565, 0
        %v585 = vsel %vm577, %v566, 0
        %v588 = vsel %vm577, %v567, 0
        %590 = vmatprep.subr.mxu0 0.0
        %591 = vmatpush1.msra.mxu0 %v568
        %592 = vmatprep.subr.mxu0 0.0
        %593 = vmatpush1.msra.mxu0 %v569
        %594 = vmatprep.subr.mxu0 0.0
        %595 = vmatpush1.msra.mxu0 0.0
        %596 = vmatprep.subr.mxu0 0.0
        %597 = vmatpush1.msra.mxu0 0.0
        %598 = vmatprep.subr.mxu0 0.0
        %599 = vmatpush1.msra.mxu0 0.0
        %600 = vmatprep.subr.mxu0 0.0
        %601 = vmatpush1.msra.mxu0 0.0
        %602 = vmatprep.subr.mxu0 0.0
        %603 = vmatpush1.msra.mxu0 0.0
        %604 = vmatprep.subr.mxu0 0.0
        %605 = vmatpush1.msra.mxu0 0.0
        %606 = vmatprep.subr.mxu0 0.0
        %607 = vmatpush1.msra.mxu0 0.0
        %608 = vmatprep.subr.mxu0 0.0
        %609 = vmatpush1.msra.mxu0 0.0
        %610 = vmatprep.subr.mxu0 0.0
        %611 = vmatpush1.msra.mxu0 0.0
        %612 = vmatprep.subr.mxu0 0.0
        %613 = vmatpush1.msra.mxu0 0.0
        %614 = vmatprep.subr.mxu0 0.0
        %615 = vmatpush1.msra.mxu0 0.0
        %616 = vmatprep.subr.mxu0 0.0
        %617 = vmatpush1.msra.mxu0 0.0
        %618 = vmatprep.subr.mxu0 0.0
        %619 = vmatpush1.msra.mxu0 0.0
        %620 = vmatprep.subr.mxu0 0.0
        %621 = vmatpush1.msra.mxu0 0.0
        %622 = vmatprep.subr.mxu0 0.0
        %623 = vmatpush1.msra.mxu0 0.0
        %624 = vmatprep.subr.mxu0 0.0
        %625 = vmatpush1.msra.mxu0 0.0
        %626 = vmatprep.subr.mxu0 0.0
        %627 = vmatpush1.msra.mxu0 0.0
        %628 = vmatprep.subr.mxu0 0.0
        %629 = vmatpush1.msra.mxu0 0.0
        %630 = vmatprep.subr.mxu0 0.0
        %631 = vmatpush1.msra.mxu0 0.0
        %632 = vmatprep.subr.mxu0 0.0
        %633 = vmatpush1.msra.mxu0 0.0
        %634 = vmatprep.subr.mxu0 0.0
        %635 = vmatpush1.msra.mxu0 0.0
        %636 = vmatprep.subr.mxu0 0.0
        %637 = vmatpush1.msra.mxu0 0.0
        %638 = vmatprep.subr.mxu0 0.0
        %639 = vmatpush1.msra.mxu0 0.0
        %640 = vmatprep.subr.mxu0 0.0
        %641 = vmatpush1.msra.mxu0 0.0
        %642 = vmatprep.subr.mxu0 0.0
        %643 = vmatpush1.msra.mxu0 0.0
        %644 = vmatprep.subr.mxu0 0.0
        %645 = vmatpush1.msra.mxu0 0.0
        %646 = vmatprep.subr.mxu0 0.0
        %647 = vmatpush1.msra.mxu0 0.0
        %648 = vmatprep.subr.mxu0 0.0
        %649 = vmatpush1.msra.mxu0 0.0
        %650 = vmatprep.subr.mxu0 0.0
        %651 = vmatpush1.msra.mxu0 0.0
        %652 = vmatprep.subr.mxu0 0.0
        %653 = vmatpush1.msra.mxu0 0.0
        %654 = vmatprep.mubr.f32.mxu0 0.0
        %655 = vmatmul.mubr.f32.gmra.mrb[0].mxu0 %v579
        %v656 = vpop.f32.mrb[0].mxu0
        %v657 = vadd.f32 %v575, %v656
        %v658 = vpop.f32.mrb[0].mxu0
        %659 = vmatprep.mubr.f32.mxu0 0.0
        %660 = vmatmul.mubr.f32.gmra.mrb[0].mxu0 %v582
        %v661 = vpop.f32.mrb[0].mxu0
        %v662 = vadd.f32 %v575, %v661
        %v663 = vpop.f32.mrb[0].mxu0
        %664 = vmatprep.mubr.f32.mxu0 0.0
        %665 = vmatmul.mubr.f32.gmra.mrb[0].mxu0 %v585
        %v666 = vpop.f32.mrb[0].mxu0
        %v667 = vadd.f32 %v575, %v666
        %v668 = vpop.f32.mrb[0].mxu0
        %669 = vmatprep.mubr.f32.mxu0 0.0
        %670 = vmatmul.mubr.f32.gmra.mrb[0].mxu0 %v588
        %v671 = vpop.f32.mrb[0].mxu0
        %v672 = vadd.f32 %v575, %v671
        %v673 = vpop.f32.mrb[0].mxu0
        %674 = vdwg.mxu0
        %v675 = vmax.f32 %v657, 0.0
        %v676 = vmax.f32 %v662, 0.0
        %v677 = vmax.f32 %v667, 0.0
        %v678 = vmax.f32 %v672, 0.0
        %v679 = vld [vmem:[%s5] sm:$0xff]
        %v680 = vld [vmem:[%s5 + $0x8] sm:$0xff]
        %v681 = vld [vmem:[%s5 + $0x10] sm:$0xff]
        %v682 = vld [vmem:[%s5 + $0x18] sm:$0xff]
        %v683 = vld [vmem:[%s6] sm:$0x1]
        %v685 = vlaneseq
        %v686 = vshrl.u32 %v685, 7
        %v687 = vsub.s32 0, %v686
        %v688 = vrot.slane %v683, %v687
        %vm690 = vcmask 261120
        %v692 = vsel %vm690, %v675, 0
        %v695 = vsel %vm690, %v676, 0
        %v698 = vsel %vm690, %v677, 0
        %v701 = vsel %vm690, %v678, 0
        %703 = vmatprep.subr.mxu0 0.0
        %704 = vmatpush1.msra.mxu0 %v679
        %705 = vmatprep.subr.mxu0 0.0
        %706 = vmatpush1.msra.mxu0 %v680
        %707 = vmatprep.subr.mxu0 0.0
        %708 = vmatpush1.msra.mxu0 %v681
        %709 = vmatprep.subr.mxu0 0.0
        %710 = vmatpush1.msra.mxu0 %v682
        %711 = vmatprep.subr.mxu0 0.0
        %712 = vmatpush1.msra.mxu0 0.0
        %713 = vmatprep.subr.mxu0 0.0
        %714 = vmatpush1.msra.mxu0 0.0
        %715 = vmatprep.subr.mxu0 0.0
        %716 = vmatpush1.msra.mxu0 0.0
        %717 = vmatprep.subr.mxu0 0.0
        %718 = vmatpush1.msra.mxu0 0.0
        %719 = vmatprep.subr.mxu0 0.0
        %720 = vmatpush1.msra.mxu0 0.0
        %721 = vmatprep.subr.mxu0 0.0
        %722 = vmatpush1.msra.mxu0 0.0
        %723 = vmatprep.subr.mxu0 0.0
        %724 = vmatpush1.msra.mxu0 0.0
        %725 = vmatprep.subr.mxu0 0.0
        %726 = vmatpush1.msra.mxu0 0.0
        %727 = vmatprep.subr.mxu0 0.0
        %728 = vmatpush1.msra.mxu0 0.0
        %729 = vmatprep.subr.mxu0 0.0
        %730 = vmatpush1.msra.mxu0 0.0
        %731 = vmatprep.subr.mxu0 0.0
        %732 = vmatpush1.msra.mxu0 0.0
        %733 = vmatprep.subr.mxu0 0.0
        %734 = vmatpush1.msra.mxu0 0.0
        %735 = vmatprep.subr.mxu0 0.0
        %736 = vmatpush1.msra.mxu0 0.0
        %737 = vmatprep.subr.mxu0 0.0
        %738 = vmatpush1.msra.mxu0 0.0
        %739 = vmatprep.subr.mxu0 0.0
        %740 = vmatpush1.msra.mxu0 0.0
        %741 = vmatprep.subr.mxu0 0.0
        %742 = vmatpush1.msra.mxu0 0.0
        %743 = vmatprep.subr.mxu0 0.0
        %744 = vmatpush1.msra.mxu0 0.0
        %745 = vmatprep.subr.mxu0 0.0
        %746 = vmatpush1.msra.mxu0 0.0
        %747 = vmatprep.subr.mxu0 0.0
        %748 = vmatpush1.msra.mxu0 0.0
        %749 = vmatprep.subr.mxu0 0.0
        %750 = vmatpush1.msra.mxu0 0.0
        %751 = vmatprep.subr.mxu0 0.0
        %752 = vmatpush1.msra.mxu0 0.0
        %753 = vmatprep.subr.mxu0 0.0
        %754 = vmatpush1.msra.mxu0 0.0
        %755 = vmatprep.subr.mxu0 0.0
        %756 = vmatpush1.msra.mxu0 0.0
        %757 = vmatprep.subr.mxu0 0.0
        %758 = vmatpush1.msra.mxu0 0.0
        %759 = vmatprep.subr.mxu0 0.0
        %760 = vmatpush1.msra.mxu0 0.0
        %761 = vmatprep.subr.mxu0 0.0
        %762 = vmatpush1.msra.mxu0 0.0
        %763 = vmatprep.subr.mxu0 0.0
        %764 = vmatpush1.msra.mxu0 0.0
        %765 = vmatprep.subr.mxu0 0.0
        %766 = vmatpush1.msra.mxu0 0.0
        %767 = vmatprep.mubr.f32.mxu0 0.0
        %768 = vmatmul.mubr.f32.gmra.mrb[0].mxu0 %v692
        %v769 = vpop.f32.mrb[0].mxu0
        %v770 = vadd.f32 %v688, %v769
        %v771 = vpop.f32.mrb[0].mxu0
        %772 = vmatprep.mubr.f32.mxu0 0.0
        %773 = vmatmul.mubr.f32.gmra.mrb[0].mxu0 %v695
        %v774 = vpop.f32.mrb[0].mxu0
        %v775 = vadd.f32 %v688, %v774
        %v776 = vpop.f32.mrb[0].mxu0
        %777 = vmatprep.mubr.f32.mxu0 0.0
        %778 = vmatmul.mubr.f32.gmra.mrb[0].mxu0 %v698
        %v779 = vpop.f32.mrb[0].mxu0
        %v780 = vadd.f32 %v688, %v779
        %v781 = vpop.f32.mrb[0].mxu0
        %782 = vmatprep.mubr.f32.mxu0 0.0
        %783 = vmatmul.mubr.f32.gmra.mrb[0].mxu0 %v701
        %v784 = vpop.f32.mrb[0].mxu0
        %v785 = vadd.f32 %v688, %v784
        %v786 = vpop.f32.mrb[0].mxu0
        %787 = vdwg.mxu0
        %v788 = vmax.f32 %v770, 0.0
        %v789 = vmax.f32 %v775, 0.0
        %v790 = vmax.f32 %v780, 0.0
        %v791 = vmax.f32 %v785, 0.0
        %v792 = vld [vmem:[%s7] sm:$0xff]
        %v793 = vld [vmem:[%s7 + $0x8] sm:$0xff]
        %v794 = vld [vmem:[%s7 + $0x10] sm:$0xff]
        %v795 = vld [vmem:[%s7 + $0x18] sm:$0xff]
        %v796 = vld [vmem:[%s8] sm:$0x1]
        %v798 = vlaneseq
        %v799 = vshrl.u32 %v798, 7
        %v800 = vsub.s32 0, %v799
        %v801 = vrot.slane %v796, %v800
        %v804 = vsel %vm690, %v788, 0
        %v807 = vsel %vm690, %v789, 0
        %v810 = vsel %vm690, %v790, 0
        %v813 = vsel %vm690, %v791, 0
        %815 = vmatprep.subr.mxu0 0.0
        %816 = vmatpush1.msra.mxu0 %v792
        %817 = vmatprep.subr.mxu0 0.0
        %818 = vmatpush1.msra.mxu0 %v793
        %819 = vmatprep.subr.mxu0 0.0
        %820 = vmatpush1.msra.mxu0 %v794
        %821 = vmatprep.subr.mxu0 0.0
        %822 = vmatpush1.msra.mxu0 %v795
        %823 = vmatprep.subr.mxu0 0.0
        %824 = vmatpush1.msra.mxu0 0.0
        %825 = vmatprep.subr.mxu0 0.0
        %826 = vmatpush1.msra.mxu0 0.0
        %827 = vmatprep.subr.mxu0 0.0
        %828 = vmatpush1.msra.mxu0 0.0
        %829 = vmatprep.subr.mxu0 0.0
        %830 = vmatpush1.msra.mxu0 0.0
        %831 = vmatprep.subr.mxu0 0.0
        %832 = vmatpush1.msra.mxu0 0.0
        %833 = vmatprep.subr.mxu0 0.0
        %834 = vmatpush1.msra.mxu0 0.0
        %835 = vmatprep.subr.mxu0 0.0
        %836 = vmatpush1.msra.mxu0 0.0
        %837 = vmatprep.subr.mxu0 0.0
        %838 = vmatpush1.msra.mxu0 0.0
        %839 = vmatprep.subr.mxu0 0.0
        %840 = vmatpush1.msra.mxu0 0.0
        %841 = vmatprep.subr.mxu0 0.0
        %842 = vmatpush1.msra.mxu0 0.0
        %843 = vmatprep.subr.mxu0 0.0
        %844 = vmatpush1.msra.mxu0 0.0
        %845 = vmatprep.subr.mxu0 0.0
        %846 = vmatpush1.msra.mxu0 0.0
        %847 = vmatprep.subr.mxu0 0.0
        %848 = vmatpush1.msra.mxu0 0.0
        %849 = vmatprep.subr.mxu0 0.0
        %850 = vmatpush1.msra.mxu0 0.0
        %851 = vmatprep.subr.mxu0 0.0
        %852 = vmatpush1.msra.mxu0 0.0
        %853 = vmatprep.subr.mxu0 0.0
        %854 = vmatpush1.msra.mxu0 0.0
        %855 = vmatprep.subr.mxu0 0.0
        %856 = vmatpush1.msra.mxu0 0.0
        %857 = vmatprep.subr.mxu0 0.0
        %858 = vmatpush1.msra.mxu0 0.0
        %859 = vmatprep.subr.mxu0 0.0
        %860 = vmatpush1.msra.mxu0 0.0
        %861 = vmatprep.subr.mxu0 0.0
        %862 = vmatpush1.msra.mxu0 0.0
        %863 = vmatprep.subr.mxu0 0.0
        %864 = vmatpush1.msra.mxu0 0.0
        %865 = vmatprep.subr.mxu0 0.0
        %866 = vmatpush1.msra.mxu0 0.0
        %867 = vmatprep.subr.mxu0 0.0
        %868 = vmatpush1.msra.mxu0 0.0
        %869 = vmatprep.subr.mxu0 0.0
        %870 = vmatpush1.msra.mxu0 0.0
        %871 = vmatprep.subr.mxu0 0.0
        %872 = vmatpush1.msra.mxu0 0.0
        %873 = vmatprep.subr.mxu0 0.0
        %874 = vmatpush1.msra.mxu0 0.0
        %875 = vmatprep.subr.mxu0 0.0
        %876 = vmatpush1.msra.mxu0 0.0
        %877 = vmatprep.subr.mxu0 0.0
        %878 = vmatpush1.msra.mxu0 0.0
        %879 = vmatprep.mubr.f32.mxu0 0.0
        %880 = vmatmul.mubr.f32.gmra.mrb[0].mxu0 %v804
        %v881 = vpop.f32.mrb[0].mxu0
        %v882 = vadd.f32 %v801, %v881
        %v883 = vpop.f32.mrb[0].mxu0
        %884 = vmatprep.mubr.f32.mxu0 0.0
        %885 = vmatmul.mubr.f32.gmra.mrb[0].mxu0 %v807
        %v886 = vpop.f32.mrb[0].mxu0
        %v887 = vadd.f32 %v801, %v886
        %v888 = vpop.f32.mrb[0].mxu0
        %889 = vmatprep.mubr.f32.mxu0 0.0
        %890 = vmatmul.mubr.f32.gmra.mrb[0].mxu0 %v810
        %v891 = vpop.f32.mrb[0].mxu0
        %v892 = vadd.f32 %v801, %v891
        %v893 = vpop.f32.mrb[0].mxu0
        %894 = vmatprep.mubr.f32.mxu0 0.0
        %895 = vmatmul.mubr.f32.gmra.mrb[0].mxu0 %v813
        %v896 = vpop.f32.mrb[0].mxu0
        %v897 = vadd.f32 %v801, %v896
        %v898 = vpop.f32.mrb[0].mxu0
        %899 = vdwg.mxu0
        %v900 = vmax.f32 %v882, 0.0
        %v901 = vmax.f32 %v887, 0.0
        %v902 = vmax.f32 %v892, 0.0
        %v903 = vmax.f32 %v897, 0.0
        %v904 = vld [vmem:[%s9] sm:$0xff]
        %v905 = vld [vmem:[%s9 + $0x8] sm:$0xff]
        %v906 = vld [vmem:[%s9 + $0x10] sm:$0xff]
        %v907 = vld [vmem:[%s9 + $0x18] sm:$0xff]
        %v908 = vld [vmem:[%s10] sm:$0x1]
        %v910 = vlaneseq
        %v911 = vshrl.u32 %v910, 7
        %v912 = vsub.s32 0, %v911
        %v913 = vrot.slane %v908, %v912
        %v916 = vsel %vm690, %v900, 0
        %v919 = vsel %vm690, %v901, 0
        %v922 = vsel %vm690, %v902, 0
        %v925 = vsel %vm690, %v903, 0
        %927 = vmatprep.subr.mxu0 0.0
        %928 = vmatpush1.msra.mxu0 %v904
        %929 = vmatprep.subr.mxu0 0.0
        %930 = vmatpush1.msra.mxu0 %v905
        %931 = vmatprep.subr.mxu0 0.0
        %932 = vmatpush1.msra.mxu0 %v906
        %933 = vmatprep.subr.mxu0 0.0
        %934 = vmatpush1.msra.mxu0 %v907
        %935 = vmatprep.subr.mxu0 0.0
        %936 = vmatpush1.msra.mxu0 0.0
        %937 = vmatprep.subr.mxu0 0.0
        %938 = vmatpush1.msra.mxu0 0.0
        %939 = vmatprep.subr.mxu0 0.0
        %940 = vmatpush1.msra.mxu0 0.0
        %941 = vmatprep.subr.mxu0 0.0
        %942 = vmatpush1.msra.mxu0 0.0
        %943 = vmatprep.subr.mxu0 0.0
        %944 = vmatpush1.msra.mxu0 0.0
        %945 = vmatprep.subr.mxu0 0.0
        %946 = vmatpush1.msra.mxu0 0.0
        %947 = vmatprep.subr.mxu0 0.0
        %948 = vmatpush1.msra.mxu0 0.0
        %949 = vmatprep.subr.mxu0 0.0
        %950 = vmatpush1.msra.mxu0 0.0
        %951 = vmatprep.subr.mxu0 0.0
        %952 = vmatpush1.msra.mxu0 0.0
        %953 = vmatprep.subr.mxu0 0.0
        %954 = vmatpush1.msra.mxu0 0.0
        %955 = vmatprep.subr.mxu0 0.0
        %956 = vmatpush1.msra.mxu0 0.0
        %957 = vmatprep.subr.mxu0 0.0
        %958 = vmatpush1.msra.mxu0 0.0
        %959 = vmatprep.subr.mxu0 0.0
        %960 = vmatpush1.msra.mxu0 0.0
        %961 = vmatprep.subr.mxu0 0.0
        %962 = vmatpush1.msra.mxu0 0.0
        %963 = vmatprep.subr.mxu0 0.0
        %964 = vmatpush1.msra.mxu0 0.0
        %965 = vmatprep.subr.mxu0 0.0
        %966 = vmatpush1.msra.mxu0 0.0
        %967 = vmatprep.subr.mxu0 0.0
        %968 = vmatpush1.msra.mxu0 0.0
        %969 = vmatprep.subr.mxu0 0.0
        %970 = vmatpush1.msra.mxu0 0.0
        %971 = vmatprep.subr.mxu0 0.0
        %972 = vmatpush1.msra.mxu0 0.0
        %973 = vmatprep.subr.mxu0 0.0
        %974 = vmatpush1.msra.mxu0 0.0
        %975 = vmatprep.subr.mxu0 0.0
        %976 = vmatpush1.msra.mxu0 0.0
        %977 = vmatprep.subr.mxu0 0.0
        %978 = vmatpush1.msra.mxu0 0.0
        %979 = vmatprep.subr.mxu0 0.0
        %980 = vmatpush1.msra.mxu0 0.0
        %981 = vmatprep.subr.mxu0 0.0
        %982 = vmatpush1.msra.mxu0 0.0
        %983 = vmatprep.subr.mxu0 0.0
        %984 = vmatpush1.msra.mxu0 0.0
        %985 = vmatprep.subr.mxu0 0.0
        %986 = vmatpush1.msra.mxu0 0.0
        %987 = vmatprep.subr.mxu0 0.0
        %988 = vmatpush1.msra.mxu0 0.0
        %989 = vmatprep.subr.mxu0 0.0
        %990 = vmatpush1.msra.mxu0 0.0
        %991 = vmatprep.mubr.f32.mxu0 0.0
        %992 = vmatmul.mubr.f32.gmra.mrb[0].mxu0 %v916
        %v993 = vpop.f32.mrb[0].mxu0
        %v994 = vadd.f32 %v913, %v993
        %v995 = vpop.f32.mrb[0].mxu0
        %996 = vmatprep.mubr.f32.mxu0 0.0
        %997 = vmatmul.mubr.f32.gmra.mrb[0].mxu0 %v919
        %v998 = vpop.f32.mrb[0].mxu0
        %v999 = vadd.f32 %v913, %v998
        %v1000 = vpop.f32.mrb[0].mxu0
        %1001 = vmatprep.mubr.f32.mxu0 0.0
        %1002 = vmatmul.mubr.f32.gmra.mrb[0].mxu0 %v922
        %v1003 = vpop.f32.mrb[0].mxu0
        %v1004 = vadd.f32 %v913, %v1003
        %v1005 = vpop.f32.mrb[0].mxu0
        %1006 = vmatprep.mubr.f32.mxu0 0.0
        %1007 = vmatmul.mubr.f32.gmra.mrb[0].mxu0 %v925
        %v1008 = vpop.f32.mrb[0].mxu0
        %v1009 = vadd.f32 %v913, %v1008
        %v1010 = vpop.f32.mrb[0].mxu0
        %1011 = vdwg.mxu0
        %1012 = vmax.xlane.f32.xlu0 %v994
        %v1013 = vpop.xlane.xlu0 %1012
        %1014 = vmax.xlane.f32.xlu0 %v999
        %v1015 = vpop.xlane.xlu0 %1014
        %1016 = vmax.xlane.f32.xlu0 %v1004
        %v1017 = vpop.xlane.xlu0 %1016
        %1018 = vmax.xlane.f32.xlu0 %v1009
        %v1019 = vpop.xlane.xlu0 %1018
        %v1020 = vsub.f32 %v994, %v1013
        %v1021 = vsub.f32 %v999, %v1015
        %v1022 = vsub.f32 %v1004, %v1017
        %v1023 = vsub.f32 %v1009, %v1019
        %v1024 = vmul.f32 %v1020, 1.442695
        %v1025 = vpow.pop %v1024
        %v1026 = vmul.f32 %v1021, 1.442695
        %v1027 = vpow.pop %v1026
        %v1028 = vmul.f32 %v1022, 1.442695
        %v1029 = vpow.pop %v1028
        %v1030 = vmul.f32 %v1023, 1.442695
        %v1031 = vpow.pop %v1030
        %1032 = vadd.xlane.f32.xlu0 %v1025
        %v1033 = vpop.xlane.xlu0 %1032
        %1034 = vadd.xlane.f32.xlu0 %v1027
        %v1035 = vpop.xlane.xlu0 %1034
        %1036 = vadd.xlane.f32.xlu0 %v1029
        %v1037 = vpop.xlane.xlu0 %1036
        %1038 = vadd.xlane.f32.xlu0 %v1031
        %v1039 = vpop.xlane.xlu0 %1038
        %v1040 = vrcp.pop %v1033
        %v1041 = vrcp.pop %v1035
        %v1042 = vrcp.pop %v1037
        %v1043 = vrcp.pop %v1039
        %v1044 = vmul.f32 %v1025, %v1040
        %v1045 = vmul.f32 %v1027, %v1041
        %v1046 = vmul.f32 %v1029, %v1042
        %v1047 = vmul.f32 %v1031, %v1043
        %v1048 = vmax.f32 %v1044, 1e-07
        %v1049 = vmax.f32 %v1045, 1e-07
        %v1050 = vmax.f32 %v1046, 1e-07
        %v1051 = vmax.f32 %v1047, 1e-07
        %v1052 = vmin.f32 %v1048, 0.9999999
        %v1053 = vmin.f32 %v1049, 0.9999999
        %v1054 = vmin.f32 %v1050, 0.9999999
        %v1055 = vmin.f32 %v1051, 0.9999999
        %v1056 = vld [vmem:[%s11] sm:$0xff]
        %v1057 = vld [vmem:[%s11 + $0x8] sm:$0xff]
        %v1058 = vld [vmem:[%s11 + $0x10] sm:$0xff]
        %v1059 = vld [vmem:[%s11 + $0x18] sm:$0xff]
        %v1060 = vld [vmem:[%s12] sm:$0x1]
        %v1062 = vlaneseq
        %v1063 = vshrl.u32 %v1062, 7
        %v1064 = vsub.s32 0, %v1063
        %v1065 = vrot.slane %v1060, %v1064
        %1067 = vmatprep.subr.mxu0 0.0
        %1068 = vmatpush1.msra.mxu0 %v1056
        %1069 = vmatprep.subr.mxu0 0.0
        %1070 = vmatpush1.msra.mxu0 %v1057
        %1071 = vmatprep.subr.mxu0 0.0
        %1072 = vmatpush1.msra.mxu0 %v1058
        %1073 = vmatprep.subr.mxu0 0.0
        %1074 = vmatpush1.msra.mxu0 %v1059
        %1075 = vmatprep.subr.mxu0 0.0
        %1076 = vmatpush1.msra.mxu0 0.0
        %1077 = vmatprep.subr.mxu0 0.0
        %1078 = vmatpush1.msra.mxu0 0.0
        %1079 = vmatprep.subr.mxu0 0.0
        %1080 = vmatpush1.msra.mxu0 0.0
        %1081 = vmatprep.subr.mxu0 0.0
        %1082 = vmatpush1.msra.mxu0 0.0
        %1083 = vmatprep.subr.mxu0 0.0
        %1084 = vmatpush1.msra.mxu0 0.0
        %1085 = vmatprep.subr.mxu0 0.0
        %1086 = vmatpush1.msra.mxu0 0.0
        %1087 = vmatprep.subr.mxu0 0.0
        %1088 = vmatpush1.msra.mxu0 0.0
        %1089 = vmatprep.subr.mxu0 0.0
        %1090 = vmatpush1.msra.mxu0 0.0
        %1091 = vmatprep.subr.mxu0 0.0
        %1092 = vmatpush1.msra.mxu0 0.0
        %1093 = vmatprep.subr.mxu0 0.0
        %1094 = vmatpush1.msra.mxu0 0.0
        %1095 = vmatprep.subr.mxu0 0.0
        %1096 = vmatpush1.msra.mxu0 0.0
        %1097 = vmatprep.subr.mxu0 0.0
        %1098 = vmatpush1.msra.mxu0 0.0
        %1099 = vmatprep.subr.mxu0 0.0
        %1100 = vmatpush1.msra.mxu0 0.0
        %1101 = vmatprep.subr.mxu0 0.0
        %1102 = vmatpush1.msra.mxu0 0.0
        %1103 = vmatprep.subr.mxu0 0.0
        %1104 = vmatpush1.msra.mxu0 0.0
        %1105 = vmatprep.subr.mxu0 0.0
        %1106 = vmatpush1.msra.mxu0 0.0
        %1107 = vmatprep.subr.mxu0 0.0
        %1108 = vmatpush1.msra.mxu0 0.0
        %1109 = vmatprep.subr.mxu0 0.0
        %1110 = vmatpush1.msra.mxu0 0.0
        %1111 = vmatprep.subr.mxu0 0.0
        %1112 = vmatpush1.msra.mxu0 0.0
        %1113 = vmatprep.subr.mxu0 0.0
        %1114 = vmatpush1.msra.mxu0 0.0
        %1115 = vmatprep.subr.mxu0 0.0
        %1116 = vmatpush1.msra.mxu0 0.0
        %1117 = vmatprep.subr.mxu0 0.0
        %1118 = vmatpush1.msra.mxu0 0.0
        %1119 = vmatprep.subr.mxu0 0.0
        %1120 = vmatpush1.msra.mxu0 0.0
        %1121 = vmatprep.subr.mxu0 0.0
        %1122 = vmatpush1.msra.mxu0 0.0
        %1123 = vmatprep.subr.mxu0 0.0
        %1124 = vmatpush1.msra.mxu0 0.0
        %1125 = vmatprep.subr.mxu0 0.0
        %1126 = vmatpush1.msra.mxu0 0.0
        %1127 = vmatprep.subr.mxu0 0.0
        %1128 = vmatpush1.msra.mxu0 0.0
        %1129 = vmatprep.subr.mxu0 0.0
        %1130 = vmatpush1.msra.mxu0 0.0
        %1131 = vmatprep.mubr.f32.mxu0 0.0
        %1132 = vmatmul.mubr.f32.gmra.mrb[0].mxu0 %v916
        %v1133 = vpop.f32.mrb[0].mxu0
        %v1134 = vadd.f32 %v1065, %v1133
        %v1135 = vpop.f32.mrb[0].mxu0
        %1136 = vmatprep.mubr.f32.mxu0 0.0
        %1137 = vmatmul.mubr.f32.gmra.mrb[0].mxu0 %v919
        %v1138 = vpop.f32.mrb[0].mxu0
        %v1139 = vadd.f32 %v1065, %v1138
        %v1140 = vpop.f32.mrb[0].mxu0
        %1141 = vmatprep.mubr.f32.mxu0 0.0
        %1142 = vmatmul.mubr.f32.gmra.mrb[0].mxu0 %v922
        %v1143 = vpop.f32.mrb[0].mxu0
        %v1144 = vadd.f32 %v1065, %v1143
        %v1145 = vpop.f32.mrb[0].mxu0
        %1146 = vmatprep.mubr.f32.mxu0 0.0
        %1147 = vmatmul.mubr.f32.gmra.mrb[0].mxu0 %v925
        %v1148 = vpop.f32.mrb[0].mxu0
        %v1149 = vadd.f32 %v1065, %v1148
        %v1150 = vpop.f32.mrb[0].mxu0
        %1151 = vdwg.mxu0
        %v1152 = vxor.u32 %v1134, 2147483648
        %v1153 = vxor.u32 %v1139, 2147483648
        %v1154 = vxor.u32 %v1144, 2147483648
        %v1155 = vxor.u32 %v1149, 2147483648
        %v1156 = vmul.f32 %v1152, 1.442695
        %v1157 = vpow.pop %v1156
        %v1158 = vmul.f32 %v1153, 1.442695
        %v1159 = vpow.pop %v1158
        %v1160 = vmul.f32 %v1154, 1.442695
        %v1161 = vpow.pop %v1160
        %v1162 = vmul.f32 %v1155, 1.442695
        %v1163 = vpow.pop %v1162
        %v1164 = vadd.f32 %v1157, 1.0
        %v1165 = vadd.f32 %v1159, 1.0
        %v1166 = vadd.f32 %v1161, 1.0
        %v1167 = vadd.f32 %v1163, 1.0
        %v1168 = vrcp.pop %v1164
        %v1169 = vmul.f32 1.0, %v1168
        %v1170 = vrcp.pop %v1165
        %v1171 = vmul.f32 1.0, %v1170
        %v1172 = vrcp.pop %v1166
        %v1173 = vmul.f32 1.0, %v1172
        %v1174 = vrcp.pop %v1167
        %v1175 = vmul.f32 1.0, %v1174
        %v1176 = vld [vmem:[%s13] sm:$0xff]
        %v1177 = vld [vmem:[%s13 + $0x8] sm:$0xff]
        %v1178 = vld [vmem:[%s13 + $0x10] sm:$0xff]
        %v1179 = vld [vmem:[%s13 + $0x18] sm:$0xff]
        %v1180 = vld [vmem:[%s13 + $0x20] sm:$0xff]
        %v1181 = vld [vmem:[%s13 + $0x28] sm:$0xff]
        %v1182 = vld [vmem:[%s13 + $0x30] sm:$0xff]
        %v1183 = vld [vmem:[%s13 + $0x38] sm:$0xff]
        %v1184 = vld [vmem:[%s13 + $0x40] sm:$0xff]
        %v1185 = vld [vmem:[%s13 + $0x48] sm:$0xff]
        %v1186 = vld [vmem:[%s13 + $0x50] sm:$0xff]
        %v1187 = vld [vmem:[%s13 + $0x58] sm:$0xff]
        %v1188 = vld [vmem:[%s13 + $0x60] sm:$0xff]
        %v1189 = vld [vmem:[%s13 + $0x68] sm:$0xff]
        %v1190 = vld [vmem:[%s13 + $0x70] sm:$0xff]
        %v1191 = vld [vmem:[%s13 + $0x78] sm:$0xff]
        %v1192 = vld [vmem:[%s14] sm:$0xff]
        %v1193 = vld [vmem:[%s14 + $0x8] sm:$0xff]
        %v1194 = vld [vmem:[%s14 + $0x10] sm:$0xff]
        %v1195 = vld [vmem:[%s14 + $0x18] sm:$0xff]
        %v1196 = vld [vmem:[%s14 + $0x20] sm:$0xff]
        %v1197 = vld [vmem:[%s14 + $0x28] sm:$0xff]
        %v1198 = vld [vmem:[%s14 + $0x30] sm:$0xff]
        %v1199 = vld [vmem:[%s14 + $0x38] sm:$0xff]
        %v1200 = vld [vmem:[%s14 + $0x40] sm:$0xff]
        %v1201 = vld [vmem:[%s14 + $0x48] sm:$0xff]
        %v1202 = vld [vmem:[%s14 + $0x50] sm:$0xff]
        %v1203 = vld [vmem:[%s14 + $0x58] sm:$0xff]
        %v1204 = vld [vmem:[%s14 + $0x60] sm:$0xff]
        %v1205 = vld [vmem:[%s14 + $0x68] sm:$0xff]
        %v1206 = vld [vmem:[%s14 + $0x70] sm:$0xff]
        %v1207 = vld [vmem:[%s14 + $0x78] sm:$0xff]
        %v1208 = vadd.f32 %v1052, %v1053
        %v1209 = vrot.slane %v1208, 4
        %v1210 = vadd.f32 %v1208, %v1209
        %v1211 = vrot.slane %v1210, 2
        %v1212 = vadd.f32 %v1210, %v1211
        %v1213 = vrot.slane %v1212, 1
        %v1214 = vadd.f32 %v1212, %v1213
        %v1215 = vrcp.pop %v1214
        %v1216 = vmul.f32 %v1052, %v1215
        %v1217 = vmul.f32 %v1053, %v1215
        %v1218 = vmul.f32 %v1216, %v1169
        %v1219 = vmul.f32 %v1217, %v1171
        %v1220 = vadd.f32 %v1218, %v1219
        %v1221 = vrot.slane %v1220, 4
        %v1222 = vadd.f32 %v1220, %v1221
        %v1223 = vrot.slane %v1222, 2
        %v1224 = vadd.f32 %v1222, %v1223
        %v1225 = vrot.slane %v1224, 1
        %v1226 = vadd.f32 %v1224, %v1225
        %1227 = vst [vmem:[%s518] sm:$0x1] %v1226
        %1229 = vset.pattern.permute.xlu0 0
        %1230 = vperm.xlu0 %1229, %v1192
        %v1231 = vpop.permute.xlu0 %1230
        %1234 = vset.pattern.permute.xlu0 0
        %1235 = vperm.xlu0 %1234, %v1193
        %v1236 = vpop.permute.xlu0 %1235
        %1239 = vset.pattern.permute.xlu0 0
        %1240 = vperm.xlu0 %1239, %v1194
        %v1241 = vpop.permute.xlu0 %1240
        %1244 = vset.pattern.permute.xlu0 0
        %1245 = vperm.xlu0 %1244, %v1195
        %v1246 = vpop.permute.xlu0 %1245
        %1249 = vset.pattern.permute.xlu0 0
        %1250 = vperm.xlu0 %1249, %v1196
        %v1251 = vpop.permute.xlu0 %1250
        %1254 = vset.pattern.permute.xlu0 0
        %1255 = vperm.xlu0 %1254, %v1197
        %v1256 = vpop.permute.xlu0 %1255
        %1259 = vset.pattern.permute.xlu0 0
        %1260 = vperm.xlu0 %1259, %v1198
        %v1261 = vpop.permute.xlu0 %1260
        %1264 = vset.pattern.permute.xlu0 0
        %1265 = vperm.xlu0 %1264, %v1199
        %v1266 = vpop.permute.xlu0 %1265
        %1269 = vset.pattern.permute.xlu0 0
        %1270 = vperm.xlu0 %1269, %v1200
        %v1271 = vpop.permute.xlu0 %1270
        %1274 = vset.pattern.permute.xlu0 0
        %1275 = vperm.xlu0 %1274, %v1201
        %v1276 = vpop.permute.xlu0 %1275
        %1279 = vset.pattern.permute.xlu0 0
        %1280 = vperm.xlu0 %1279, %v1202
        %v1281 = vpop.permute.xlu0 %1280
        %1284 = vset.pattern.permute.xlu0 0
        %1285 = vperm.xlu0 %1284, %v1203
        %v1286 = vpop.permute.xlu0 %1285
        %1289 = vset.pattern.permute.xlu0 0
        %1290 = vperm.xlu0 %1289, %v1204
        %v1291 = vpop.permute.xlu0 %1290
        %1294 = vset.pattern.permute.xlu0 0
        %1295 = vperm.xlu0 %1294, %v1205
        %v1296 = vpop.permute.xlu0 %1295
        %1299 = vset.pattern.permute.xlu0 0
        %1300 = vperm.xlu0 %1299, %v1206
        %v1301 = vpop.permute.xlu0 %1300
        %1304 = vset.pattern.permute.xlu0 0
        %1305 = vperm.xlu0 %1304, %v1207
        %v1306 = vpop.permute.xlu0 %1305
        %v1309 = vsel %vm690, %v1176, 0
        %v1312 = vsel %vm690, %v1177, 0
        %v1315 = vsel %vm690, %v1178, 0
        %v1318 = vsel %vm690, %v1179, 0
        %v1321 = vsel %vm690, %v1180, 0
        %v1324 = vsel %vm690, %v1181, 0
        %v1327 = vsel %vm690, %v1182, 0
        %v1330 = vsel %vm690, %v1183, 0
        %v1333 = vsel %vm690, %v1184, 0
        %v1336 = vsel %vm690, %v1185, 0
        %v1339 = vsel %vm690, %v1186, 0
        %v1342 = vsel %vm690, %v1187, 0
        %v1345 = vsel %vm690, %v1188, 0
        %v1348 = vsel %vm690, %v1189, 0
        %v1351 = vsel %vm690, %v1190, 0
        %v1354 = vsel %vm690, %v1191, 0
        %1356 = vmatprep.subr.mxu0 0.0
        %1357 = vmatpush1.xpose.msra.mxu0 %v916
        %1358 = vmatprep.subr.mxu0 0.0
        %1359 = vmatpush1.xpose.msra.mxu0 %v919
        %1360 = vmatprep.subr.mxu0 0.0
        %1361 = vmatpush1.xpose.msra.mxu0 0.0
        %1362 = vmatprep.subr.mxu0 0.0
        %1363 = vmatpush1.xpose.msra.mxu0 0.0
        %1364 = vmatprep.subr.mxu0 0.0
        %1365 = vmatpush1.xpose.msra.mxu0 0.0
        %1366 = vmatprep.subr.mxu0 0.0
        %1367 = vmatpush1.xpose.msra.mxu0 0.0
        %1368 = vmatprep.subr.mxu0 0.0
        %1369 = vmatpush1.xpose.msra.mxu0 0.0
        %1370 = vmatprep.subr.mxu0 0.0
        %1371 = vmatpush1.xpose.msra.mxu0 0.0
        %1372 = vmatprep.subr.mxu0 0.0
        %1373 = vmatpush1.xpose.msra.mxu0 0.0
        %1374 = vmatprep.subr.mxu0 0.0
        %1375 = vmatpush1.xpose.msra.mxu0 0.0
        %1376 = vmatprep.subr.mxu0 0.0
        %1377 = vmatpush1.xpose.msra.mxu0 0.0
        %1378 = vmatprep.subr.mxu0 0.0
        %1379 = vmatpush1.xpose.msra.mxu0 0.0
        %1380 = vmatprep.subr.mxu0 0.0
        %1381 = vmatpush1.xpose.msra.mxu0 0.0
        %1382 = vmatprep.subr.mxu0 0.0
        %1383 = vmatpush1.xpose.msra.mxu0 0.0
        %1384 = vmatprep.subr.mxu0 0.0
        %1385 = vmatpush1.xpose.msra.mxu0 0.0
        %1386 = vmatprep.subr.mxu0 0.0
        %1387 = vmatpush1.xpose.msra.mxu0 0.0
        %1388 = vmatprep.subr.mxu0 0.0
        %1389 = vmatpush1.xpose.msra.mxu0 0.0
        %1390 = vmatprep.subr.mxu0 0.0
        %1391 = vmatpush1.xpose.msra.mxu0 0.0
        %1392 = vmatprep.subr.mxu0 0.0
        %1393 = vmatpush1.xpose.msra.mxu0 0.0
        %1394 = vmatprep.subr.mxu0 0.0
        %1395 = vmatpush1.xpose.msra.mxu0 0.0
        %1396 = vmatprep.subr.mxu0 0.0
        %1397 = vmatpush1.xpose.msra.mxu0 0.0
        %1398 = vmatprep.subr.mxu0 0.0
        %1399 = vmatpush1.xpose.msra.mxu0 0.0
        %1400 = vmatprep.subr.mxu0 0.0
        %1401 = vmatpush1.xpose.msra.mxu0 0.0
        %1402 = vmatprep.subr.mxu0 0.0
        %1403 = vmatpush1.xpose.msra.mxu0 0.0
        %1404 = vmatprep.subr.mxu0 0.0
        %1405 = vmatpush1.xpose.msra.mxu0 0.0
        %1406 = vmatprep.subr.mxu0 0.0
        %1407 = vmatpush1.xpose.msra.mxu0 0.0
        %1408 = vmatprep.subr.mxu0 0.0
        %1409 = vmatpush1.xpose.msra.mxu0 0.0
        %1410 = vmatprep.subr.mxu0 0.0
        %1411 = vmatpush1.xpose.msra.mxu0 0.0
        %1412 = vmatprep.subr.mxu0 0.0
        %1413 = vmatpush1.xpose.msra.mxu0 0.0
        %1414 = vmatprep.subr.mxu0 0.0
        %1415 = vmatpush1.xpose.msra.mxu0 0.0
        %1416 = vmatprep.subr.mxu0 0.0
        %1417 = vmatpush1.xpose.msra.mxu0 0.0
        %1418 = vmatprep.subr.mxu0 0.0
        %1419 = vmatpush1.xpose.msra.mxu0 0.0
        %1420 = vmatprep.mubr.f32.mxu0 0.0
        %1421 = vmatmul.mubr.f32.gmra.mrb[0].mxu0 %v1309
        %v1422 = vpop.f32.mrb[0].mxu0
        %v1423 = vadd.f32 %v1231, %v1422
        %v1424 = vpop.f32.mrb[0].mxu0
        %1425 = vmatprep.mubr.f32.mxu0 0.0
        %1426 = vmatmul.mubr.f32.gmra.mrb[0].mxu0 %v1312
        %v1427 = vpop.f32.mrb[0].mxu0
        %v1428 = vadd.f32 %v1236, %v1427
        %v1429 = vpop.f32.mrb[0].mxu0
        %1430 = vmatprep.mubr.f32.mxu0 0.0
        %1431 = vmatmul.mubr.f32.gmra.mrb[0].mxu0 %v1315
        %v1432 = vpop.f32.mrb[0].mxu0
        %v1433 = vadd.f32 %v1241, %v1432
        %v1434 = vpop.f32.mrb[0].mxu0
        %1435 = vmatprep.mubr.f32.mxu0 0.0
        %1436 = vmatmul.mubr.f32.gmra.mrb[0].mxu0 %v1318
        %v1437 = vpop.f32.mrb[0].mxu0
        %v1438 = vadd.f32 %v1246, %v1437
        %v1439 = vpop.f32.mrb[0].mxu0
        %1440 = vmatprep.mubr.f32.mxu0 0.0
        %1441 = vmatmul.mubr.f32.gmra.mrb[0].mxu0 %v1321
        %v1442 = vpop.f32.mrb[0].mxu0
        %v1443 = vadd.f32 %v1251, %v1442
        %v1444 = vpop.f32.mrb[0].mxu0
        %1445 = vmatprep.mubr.f32.mxu0 0.0
        %1446 = vmatmul.mubr.f32.gmra.mrb[0].mxu0 %v1324
        %v1447 = vpop.f32.mrb[0].mxu0
        %v1448 = vadd.f32 %v1256, %v1447
        %v1449 = vpop.f32.mrb[0].mxu0
        %1450 = vmatprep.mubr.f32.mxu0 0.0
        %1451 = vmatmul.mubr.f32.gmra.mrb[0].mxu0 %v1327
        %v1452 = vpop.f32.mrb[0].mxu0
        %v1453 = vadd.f32 %v1261, %v1452
        %v1454 = vpop.f32.mrb[0].mxu0
        %1455 = vmatprep.mubr.f32.mxu0 0.0
        %1456 = vmatmul.mubr.f32.gmra.mrb[0].mxu0 %v1330
        %v1457 = vpop.f32.mrb[0].mxu0
        %v1458 = vadd.f32 %v1266, %v1457
        %v1459 = vpop.f32.mrb[0].mxu0
        %1460 = vmatprep.mubr.f32.mxu0 0.0
        %1461 = vmatmul.mubr.f32.gmra.mrb[0].mxu0 %v1333
        %v1462 = vpop.f32.mrb[0].mxu0
        %v1463 = vadd.f32 %v1271, %v1462
        %v1464 = vpop.f32.mrb[0].mxu0
        %1465 = vmatprep.mubr.f32.mxu0 0.0
        %1466 = vmatmul.mubr.f32.gmra.mrb[0].mxu0 %v1336
        %v1467 = vpop.f32.mrb[0].mxu0
        %v1468 = vadd.f32 %v1276, %v1467
        %v1469 = vpop.f32.mrb[0].mxu0
        %1470 = vmatprep.mubr.f32.mxu0 0.0
        %1471 = vmatmul.mubr.f32.gmra.mrb[0].mxu0 %v1339
        %v1472 = vpop.f32.mrb[0].mxu0
        %v1473 = vadd.f32 %v1281, %v1472
        %v1474 = vpop.f32.mrb[0].mxu0
        %1475 = vmatprep.mubr.f32.mxu0 0.0
        %1476 = vmatmul.mubr.f32.gmra.mrb[0].mxu0 %v1342
        %v1477 = vpop.f32.mrb[0].mxu0
        %v1478 = vadd.f32 %v1286, %v1477
        %v1479 = vpop.f32.mrb[0].mxu0
        %1480 = vmatprep.mubr.f32.mxu0 0.0
        %1481 = vmatmul.mubr.f32.gmra.mrb[0].mxu0 %v1345
        %v1482 = vpop.f32.mrb[0].mxu0
        %v1483 = vadd.f32 %v1291, %v1482
        %v1484 = vpop.f32.mrb[0].mxu0
        %1485 = vmatprep.mubr.f32.mxu0 0.0
        %1486 = vmatmul.mubr.f32.gmra.mrb[0].mxu0 %v1348
        %v1487 = vpop.f32.mrb[0].mxu0
        %v1488 = vadd.f32 %v1296, %v1487
        %v1489 = vpop.f32.mrb[0].mxu0
        %1490 = vmatprep.mubr.f32.mxu0 0.0
        %1491 = vmatmul.mubr.f32.gmra.mrb[0].mxu0 %v1351
        %v1492 = vpop.f32.mrb[0].mxu0
        %v1493 = vadd.f32 %v1301, %v1492
        %v1494 = vpop.f32.mrb[0].mxu0
        %1495 = vmatprep.mubr.f32.mxu0 0.0
        %1496 = vmatmul.mubr.f32.gmra.mrb[0].mxu0 %v1354
        %v1497 = vpop.f32.mrb[0].mxu0
        %v1498 = vadd.f32 %v1306, %v1497
        %v1499 = vpop.f32.mrb[0].mxu0
        %1500 = vdwg.mxu0
        %v1501 = vxor.u32 %v1423, 2147483648
        %v1502 = vxor.u32 %v1428, 2147483648
        %v1503 = vxor.u32 %v1433, 2147483648
        %v1504 = vxor.u32 %v1438, 2147483648
        %v1505 = vxor.u32 %v1443, 2147483648
        %v1506 = vxor.u32 %v1448, 2147483648
        %v1507 = vxor.u32 %v1453, 2147483648
        %v1508 = vxor.u32 %v1458, 2147483648
        %v1509 = vxor.u32 %v1463, 2147483648
        %v1510 = vxor.u32 %v1468, 2147483648
        %v1511 = vxor.u32 %v1473, 2147483648
        %v1512 = vxor.u32 %v1478, 2147483648
        %v1513 = vxor.u32 %v1483, 2147483648
        %v1514 = vxor.u32 %v1488, 2147483648
        %v1515 = vxor.u32 %v1493, 2147483648
        %v1516 = vxor.u32 %v1498, 2147483648
        %v1517 = vmul.f32 %v1501, 1.442695
        %v1518 = vpow.pop %v1517
        %v1519 = vmul.f32 %v1502, 1.442695
        %v1520 = vpow.pop %v1519
        %v1521 = vmul.f32 %v1503, 1.442695
        %v1522 = vpow.pop %v1521
        %v1523 = vmul.f32 %v1504, 1.442695
        %v1524 = vpow.pop %v1523
        %v1525 = vmul.f32 %v1505, 1.442695
        %v1526 = vpow.pop %v1525
        %v1527 = vmul.f32 %v1506, 1.442695
        %v1528 = vpow.pop %v1527
        %v1529 = vmul.f32 %v1507, 1.442695
        %v1530 = vpow.pop %v1529
        %v1531 = vmul.f32 %v1508, 1.442695
        %v1532 = vpow.pop %v1531
        %v1533 = vmul.f32 %v1509, 1.442695
        %v1534 = vpow.pop %v1533
        %v1535 = vmul.f32 %v1510, 1.442695
        %v1536 = vpow.pop %v1535
        %v1537 = vmul.f32 %v1511, 1.442695
        %v1538 = vpow.pop %v1537
        %v1539 = vmul.f32 %v1512, 1.442695
        %v1540 = vpow.pop %v1539
        %v1541 = vmul.f32 %v1513, 1.442695
        %v1542 = vpow.pop %v1541
        %v1543 = vmul.f32 %v1514, 1.442695
        %v1544 = vpow.pop %v1543
        %v1545 = vmul.f32 %v1515, 1.442695
        %v1546 = vpow.pop %v1545
        %v1547 = vmul.f32 %v1516, 1.442695
        %v1548 = vpow.pop %v1547
        %v1549 = vadd.f32 %v1518, 1.0
        %v1550 = vadd.f32 %v1520, 1.0
        %v1551 = vadd.f32 %v1522, 1.0
        %v1552 = vadd.f32 %v1524, 1.0
        %v1553 = vadd.f32 %v1526, 1.0
        %v1554 = vadd.f32 %v1528, 1.0
        %v1555 = vadd.f32 %v1530, 1.0
        %v1556 = vadd.f32 %v1532, 1.0
        %v1557 = vadd.f32 %v1534, 1.0
        %v1558 = vadd.f32 %v1536, 1.0
        %v1559 = vadd.f32 %v1538, 1.0
        %v1560 = vadd.f32 %v1540, 1.0
        %v1561 = vadd.f32 %v1542, 1.0
        %v1562 = vadd.f32 %v1544, 1.0
        %v1563 = vadd.f32 %v1546, 1.0
        %v1564 = vadd.f32 %v1548, 1.0
        %v1565 = vrcp.pop %v1549
        %v1566 = vmul.f32 1.0, %v1565
        %v1567 = vrcp.pop %v1550
        %v1568 = vmul.f32 1.0, %v1567
        %v1569 = vrcp.pop %v1551
        %v1570 = vmul.f32 1.0, %v1569
        %v1571 = vrcp.pop %v1552
        %v1572 = vmul.f32 1.0, %v1571
        %v1573 = vrcp.pop %v1553
        %v1574 = vmul.f32 1.0, %v1573
        %v1575 = vrcp.pop %v1554
        %v1576 = vmul.f32 1.0, %v1575
        %v1577 = vrcp.pop %v1555
        %v1578 = vmul.f32 1.0, %v1577
        %v1579 = vrcp.pop %v1556
        %v1580 = vmul.f32 1.0, %v1579
        %v1581 = vrcp.pop %v1557
        %v1582 = vmul.f32 1.0, %v1581
        %v1583 = vrcp.pop %v1558
        %v1584 = vmul.f32 1.0, %v1583
        %v1585 = vrcp.pop %v1559
        %v1586 = vmul.f32 1.0, %v1585
        %v1587 = vrcp.pop %v1560
        %v1588 = vmul.f32 1.0, %v1587
        %v1589 = vrcp.pop %v1561
        %v1590 = vmul.f32 1.0, %v1589
        %v1591 = vrcp.pop %v1562
        %v1592 = vmul.f32 1.0, %v1591
        %v1593 = vrcp.pop %v1563
        %v1594 = vmul.f32 1.0, %v1593
        %v1595 = vrcp.pop %v1564
        %v1596 = vmul.f32 1.0, %v1595
        %1597 = vst.msk [vmem:[%s540] sm:$0xff] %vm577, %v1566
        %1598 = vst.msk [vmem:[%s540 + $0x8] sm:$0xff] %vm577, %v1568
        %1599 = vst.msk [vmem:[%s540 + $0x10] sm:$0xff] %vm577, %v1570
        %1600 = vst.msk [vmem:[%s540 + $0x18] sm:$0xff] %vm577, %v1572
        %1601 = vst.msk [vmem:[%s540 + $0x20] sm:$0xff] %vm577, %v1574
        %1602 = vst.msk [vmem:[%s540 + $0x28] sm:$0xff] %vm577, %v1576
        %1603 = vst.msk [vmem:[%s540 + $0x30] sm:$0xff] %vm577, %v1578
        %1604 = vst.msk [vmem:[%s540 + $0x38] sm:$0xff] %vm577, %v1580
        %1605 = vst.msk [vmem:[%s540 + $0x40] sm:$0xff] %vm577, %v1582
        %1606 = vst.msk [vmem:[%s540 + $0x48] sm:$0xff] %vm577, %v1584
        %1607 = vst.msk [vmem:[%s540 + $0x50] sm:$0xff] %vm577, %v1586
        %1608 = vst.msk [vmem:[%s540 + $0x58] sm:$0xff] %vm577, %v1588
        %1609 = vst.msk [vmem:[%s540 + $0x60] sm:$0xff] %vm577, %v1590
        %1610 = vst.msk [vmem:[%s540 + $0x68] sm:$0xff] %vm577, %v1592
        %1611 = vst.msk [vmem:[%s540 + $0x70] sm:$0xff] %vm577, %v1594
        %1612 = vst.msk [vmem:[%s540 + $0x78] sm:$0xff] %vm577, %v1596
        %v1613 = vadd.f32 %v1054, %v1055
        %v1614 = vrot.slane %v1613, 4
        %v1615 = vadd.f32 %v1613, %v1614
        %v1616 = vrot.slane %v1615, 2
        %v1617 = vadd.f32 %v1615, %v1616
        %v1618 = vrot.slane %v1617, 1
        %v1619 = vadd.f32 %v1617, %v1618
        %v1620 = vrcp.pop %v1619
        %v1621 = vmul.f32 %v1054, %v1620
        %v1622 = vmul.f32 %v1055, %v1620
        %v1623 = vmul.f32 %v1621, %v1173
        %v1624 = vmul.f32 %v1622, %v1175
        %v1625 = vadd.f32 %v1623, %v1624
        %v1626 = vrot.slane %v1625, 4
        %v1627 = vadd.f32 %v1625, %v1626
        %v1628 = vrot.slane %v1627, 2
        %v1629 = vadd.f32 %v1627, %v1628
        %v1630 = vrot.slane %v1629, 1
        %v1631 = vadd.f32 %v1629, %v1630
        %s1632 = scalar_lea.vmem %s518, 1 [#allocation2]
        %1633 = vst [vmem:[%s1632] sm:$0x1] %v1631
        %1634 = vmatprep.subr.mxu0 0.0
        %1635 = vmatpush1.xpose.msra.mxu0 %v922
        %1636 = vmatprep.subr.mxu0 0.0
        %1637 = vmatpush1.xpose.msra.mxu0 %v925
        %1638 = vmatprep.subr.mxu0 0.0
        %1639 = vmatpush1.xpose.msra.mxu0 0.0
        %1640 = vmatprep.subr.mxu0 0.0
        %1641 = vmatpush1.xpose.msra.mxu0 0.0
        %1642 = vmatprep.subr.mxu0 0.0
        %1643 = vmatpush1.xpose.msra.mxu0 0.0
        %1644 = vmatprep.subr.mxu0 0.0
        %1645 = vmatpush1.xpose.msra.mxu0 0.0
        %1646 = vmatprep.subr.mxu0 0.0
        %1647 = vmatpush1.xpose.msra.mxu0 0.0
        %1648 = vmatprep.subr.mxu0 0.0
        %1649 = vmatpush1.xpose.msra.mxu0 0.0
        %1650 = vmatprep.subr.mxu0 0.0
        %1651 = vmatpush1.xpose.msra.mxu0 0.0
        %1652 = vmatprep.subr.mxu0 0.0
        %1653 = vmatpush1.xpose.msra.mxu0 0.0
        %1654 = vmatprep.subr.mxu0 0.0
        %1655 = vmatpush1.xpose.msra.mxu0 0.0
        %1656 = vmatprep.subr.mxu0 0.0
        %1657 = vmatpush1.xpose.msra.mxu0 0.0
        %1658 = vmatprep.subr.mxu0 0.0
        %1659 = vmatpush1.xpose.msra.mxu0 0.0
        %1660 = vmatprep.subr.mxu0 0.0
        %1661 = vmatpush1.xpose.msra.mxu0 0.0
        %1662 = vmatprep.subr.mxu0 0.0
        %1663 = vmatpush1.xpose.msra.mxu0 0.0
        %1664 = vmatprep.subr.mxu0 0.0
        %1665 = vmatpush1.xpose.msra.mxu0 0.0
        %1666 = vmatprep.subr.mxu0 0.0
        %1667 = vmatpush1.xpose.msra.mxu0 0.0
        %1668 = vmatprep.subr.mxu0 0.0
        %1669 = vmatpush1.xpose.msra.mxu0 0.0
        %1670 = vmatprep.subr.mxu0 0.0
        %1671 = vmatpush1.xpose.msra.mxu0 0.0
        %1672 = vmatprep.subr.mxu0 0.0
        %1673 = vmatpush1.xpose.msra.mxu0 0.0
        %1674 = vmatprep.subr.mxu0 0.0
        %1675 = vmatpush1.xpose.msra.mxu0 0.0
        %1676 = vmatprep.subr.mxu0 0.0
        %1677 = vmatpush1.xpose.msra.mxu0 0.0
        %1678 = vmatprep.subr.mxu0 0.0
        %1679 = vmatpush1.xpose.msra.mxu0 0.0
        %1680 = vmatprep.subr.mxu0 0.0
        %1681 = vmatpush1.xpose.msra.mxu0 0.0
        %1682 = vmatprep.subr.mxu0 0.0
        %1683 = vmatpush1.xpose.msra.mxu0 0.0
        %1684 = vmatprep.subr.mxu0 0.0
        %1685 = vmatpush1.xpose.msra.mxu0 0.0
        %1686 = vmatprep.subr.mxu0 0.0
        %1687 = vmatpush1.xpose.msra.mxu0 0.0
        %1688 = vmatprep.subr.mxu0 0.0
        %1689 = vmatpush1.xpose.msra.mxu0 0.0
        %1690 = vmatprep.subr.mxu0 0.0
        %1691 = vmatpush1.xpose.msra.mxu0 0.0
        %1692 = vmatprep.subr.mxu0 0.0
        %1693 = vmatpush1.xpose.msra.mxu0 0.0
        %1694 = vmatprep.subr.mxu0 0.0
        %1695 = vmatpush1.xpose.msra.mxu0 0.0
        %1696 = vmatprep.subr.mxu0 0.0
        %1697 = vmatpush1.xpose.msra.mxu0 0.0
        %1698 = vmatprep.mubr.f32.mxu0 0.0
        %1699 = vmatmul.mubr.f32.gmra.mrb[0].mxu0 %v1309
        %v1700 = vpop.f32.mrb[0].mxu0
        %v1701 = vadd.f32 %v1231, %v1700
        %v1702 = vpop.f32.mrb[0].mxu0
        %1703 = vmatprep.mubr.f32.mxu0 0.0
        %1704 = vmatmul.mubr.f32.gmra.mrb[0].mxu0 %v1312
        %v1705 = vpop.f32.mrb[0].mxu0
        %v1706 = vadd.f32 %v1236, %v1705
        %v1707 = vpop.f32.mrb[0].mxu0
        %1708 = vmatprep.mubr.f32.mxu0 0.0
        %1709 = vmatmul.mubr.f32.gmra.mrb[0].mxu0 %v1315
        %v1710 = vpop.f32.mrb[0].mxu0
        %v1711 = vadd.f32 %v1241, %v1710
        %v1712 = vpop.f32.mrb[0].mxu0
        %1713 = vmatprep.mubr.f32.mxu0 0.0
        %1714 = vmatmul.mubr.f32.gmra.mrb[0].mxu0 %v1318
        %v1715 = vpop.f32.mrb[0].mxu0
        %v1716 = vadd.f32 %v1246, %v1715
        %v1717 = vpop.f32.mrb[0].mxu0
        %1718 = vmatprep.mubr.f32.mxu0 0.0
        %1719 = vmatmul.mubr.f32.gmra.mrb[0].mxu0 %v1321
        %v1720 = vpop.f32.mrb[0].mxu0
        %v1721 = vadd.f32 %v1251, %v1720
        %v1722 = vpop.f32.mrb[0].mxu0
        %1723 = vmatprep.mubr.f32.mxu0 0.0
        %1724 = vmatmul.mubr.f32.gmra.mrb[0].mxu0 %v1324
        %v1725 = vpop.f32.mrb[0].mxu0
        %v1726 = vadd.f32 %v1256, %v1725
        %v1727 = vpop.f32.mrb[0].mxu0
        %1728 = vmatprep.mubr.f32.mxu0 0.0
        %1729 = vmatmul.mubr.f32.gmra.mrb[0].mxu0 %v1327
        %v1730 = vpop.f32.mrb[0].mxu0
        %v1731 = vadd.f32 %v1261, %v1730
        %v1732 = vpop.f32.mrb[0].mxu0
        %1733 = vmatprep.mubr.f32.mxu0 0.0
        %1734 = vmatmul.mubr.f32.gmra.mrb[0].mxu0 %v1330
        %v1735 = vpop.f32.mrb[0].mxu0
        %v1736 = vadd.f32 %v1266, %v1735
        %v1737 = vpop.f32.mrb[0].mxu0
        %1738 = vmatprep.mubr.f32.mxu0 0.0
        %1739 = vmatmul.mubr.f32.gmra.mrb[0].mxu0 %v1333
        %v1740 = vpop.f32.mrb[0].mxu0
        %v1741 = vadd.f32 %v1271, %v1740
        %v1742 = vpop.f32.mrb[0].mxu0
        %1743 = vmatprep.mubr.f32.mxu0 0.0
        %1744 = vmatmul.mubr.f32.gmra.mrb[0].mxu0 %v1336
        %v1745 = vpop.f32.mrb[0].mxu0
        %v1746 = vadd.f32 %v1276, %v1745
        %v1747 = vpop.f32.mrb[0].mxu0
        %1748 = vmatprep.mubr.f32.mxu0 0.0
        %1749 = vmatmul.mubr.f32.gmra.mrb[0].mxu0 %v1339
        %v1750 = vpop.f32.mrb[0].mxu0
        %v1751 = vadd.f32 %v1281, %v1750
        %v1752 = vpop.f32.mrb[0].mxu0
        %1753 = vmatprep.mubr.f32.mxu0 0.0
        %1754 = vmatmul.mubr.f32.gmra.mrb[0].mxu0 %v1342
        %v1755 = vpop.f32.mrb[0].mxu0
        %v1756 = vadd.f32 %v1286, %v1755
        %v1757 = vpop.f32.mrb[0].mxu0
        %1758 = vmatprep.mubr.f32.mxu0 0.0
        %1759 = vmatmul.mubr.f32.gmra.mrb[0].mxu0 %v1345
        %v1760 = vpop.f32.mrb[0].mxu0
        %v1761 = vadd.f32 %v1291, %v1760
        %v1762 = vpop.f32.mrb[0].mxu0
        %1763 = vmatprep.mubr.f32.mxu0 0.0
        %1764 = vmatmul.mubr.f32.gmra.mrb[0].mxu0 %v1348
        %v1765 = vpop.f32.mrb[0].mxu0
        %v1766 = vadd.f32 %v1296, %v1765
        %v1767 = vpop.f32.mrb[0].mxu0
        %1768 = vmatprep.mubr.f32.mxu0 0.0
        %1769 = vmatmul.mubr.f32.gmra.mrb[0].mxu0 %v1351
        %v1770 = vpop.f32.mrb[0].mxu0
        %v1771 = vadd.f32 %v1301, %v1770
        %v1772 = vpop.f32.mrb[0].mxu0
        %1773 = vmatprep.mubr.f32.mxu0 0.0
        %1774 = vmatmul.mubr.f32.gmra.mrb[0].mxu0 %v1354
        %v1775 = vpop.f32.mrb[0].mxu0
        %v1776 = vadd.f32 %v1306, %v1775
        %v1777 = vpop.f32.mrb[0].mxu0
        %1778 = vdwg.mxu0
        %v1779 = vxor.u32 %v1701, 2147483648
        %v1780 = vxor.u32 %v1706, 2147483648
        %v1781 = vxor.u32 %v1711, 2147483648
        %v1782 = vxor.u32 %v1716, 2147483648
        %v1783 = vxor.u32 %v1721, 2147483648
        %v1784 = vxor.u32 %v1726, 2147483648
        %v1785 = vxor.u32 %v1731, 2147483648
        %v1786 = vxor.u32 %v1736, 2147483648
        %v1787 = vxor.u32 %v1741, 2147483648
        %v1788 = vxor.u32 %v1746, 2147483648
        %v1789 = vxor.u32 %v1751, 2147483648
        %v1790 = vxor.u32 %v1756, 2147483648
        %v1791 = vxor.u32 %v1761, 2147483648
        %v1792 = vxor.u32 %v1766, 2147483648
        %v1793 = vxor.u32 %v1771, 2147483648
        %v1794 = vxor.u32 %v1776, 2147483648
        %v1795 = vmul.f32 %v1779, 1.442695
        %v1796 = vpow.pop %v1795
        %v1797 = vmul.f32 %v1780, 1.442695
        %v1798 = vpow.pop %v1797
        %v1799 = vmul.f32 %v1781, 1.442695
        %v1800 = vpow.pop %v1799
        %v1801 = vmul.f32 %v1782, 1.442695
        %v1802 = vpow.pop %v1801
        %v1803 = vmul.f32 %v1783, 1.442695
        %v1804 = vpow.pop %v1803
        %v1805 = vmul.f32 %v1784, 1.442695
        %v1806 = vpow.pop %v1805
        %v1807 = vmul.f32 %v1785, 1.442695
        %v1808 = vpow.pop %v1807
        %v1809 = vmul.f32 %v1786, 1.442695
        %v1810 = vpow.pop %v1809
        %v1811 = vmul.f32 %v1787, 1.442695
        %v1812 = vpow.pop %v1811
        %v1813 = vmul.f32 %v1788, 1.442695
        %v1814 = vpow.pop %v1813
        %v1815 = vmul.f32 %v1789, 1.442695
        %v1816 = vpow.pop %v1815
        %v1817 = vmul.f32 %v1790, 1.442695
        %v1818 = vpow.pop %v1817
        %v1819 = vmul.f32 %v1791, 1.442695
        %v1820 = vpow.pop %v1819
        %v1821 = vmul.f32 %v1792, 1.442695
        %v1822 = vpow.pop %v1821
        %v1823 = vmul.f32 %v1793, 1.442695
        %v1824 = vpow.pop %v1823
        %v1825 = vmul.f32 %v1794, 1.442695
        %v1826 = vpow.pop %v1825
        %v1827 = vadd.f32 %v1796, 1.0
        %v1828 = vadd.f32 %v1798, 1.0
        %v1829 = vadd.f32 %v1800, 1.0
        %v1830 = vadd.f32 %v1802, 1.0
        %v1831 = vadd.f32 %v1804, 1.0
        %v1832 = vadd.f32 %v1806, 1.0
        %v1833 = vadd.f32 %v1808, 1.0
        %v1834 = vadd.f32 %v1810, 1.0
        %v1835 = vadd.f32 %v1812, 1.0
        %v1836 = vadd.f32 %v1814, 1.0
        %v1837 = vadd.f32 %v1816, 1.0
        %v1838 = vadd.f32 %v1818, 1.0
        %v1839 = vadd.f32 %v1820, 1.0
        %v1840 = vadd.f32 %v1822, 1.0
        %v1841 = vadd.f32 %v1824, 1.0
        %v1842 = vadd.f32 %v1826, 1.0
        %v1843 = vrcp.pop %v1827
        %v1844 = vmul.f32 1.0, %v1843
        %v1845 = vrcp.pop %v1828
        %v1846 = vmul.f32 1.0, %v1845
        %v1847 = vrcp.pop %v1829
        %v1848 = vmul.f32 1.0, %v1847
        %v1849 = vrcp.pop %v1830
        %v1850 = vmul.f32 1.0, %v1849
        %v1851 = vrcp.pop %v1831
        %v1852 = vmul.f32 1.0, %v1851
        %v1853 = vrcp.pop %v1832
        %v1854 = vmul.f32 1.0, %v1853
        %v1855 = vrcp.pop %v1833
        %v1856 = vmul.f32 1.0, %v1855
        %v1857 = vrcp.pop %v1834
        %v1858 = vmul.f32 1.0, %v1857
        %v1859 = vrcp.pop %v1835
        %v1860 = vmul.f32 1.0, %v1859
        %v1861 = vrcp.pop %v1836
        %v1862 = vmul.f32 1.0, %v1861
        %v1863 = vrcp.pop %v1837
        %v1864 = vmul.f32 1.0, %v1863
        %v1865 = vrcp.pop %v1838
        %v1866 = vmul.f32 1.0, %v1865
        %v1867 = vrcp.pop %v1839
        %v1868 = vmul.f32 1.0, %v1867
        %v1869 = vrcp.pop %v1840
        %v1870 = vmul.f32 1.0, %v1869
        %v1871 = vrcp.pop %v1841
        %v1872 = vmul.f32 1.0, %v1871
        %v1873 = vrcp.pop %v1842
        %v1874 = vmul.f32 1.0, %v1873
        %s1875 = scalar_lea.vmem %s540, 128
        %1876 = vst.msk [vmem:[%s1875] sm:$0xff] %vm577, %v1844
        %1877 = vst.msk [vmem:[%s1875 + $0x8] sm:$0xff] %vm577, %v1846
        %1878 = vst.msk [vmem:[%s1875 + $0x10] sm:$0xff] %vm577, %v1848
        %1879 = vst.msk [vmem:[%s1875 + $0x18] sm:$0xff] %vm577, %v1850
        %1880 = vst.msk [vmem:[%s1875 + $0x20] sm:$0xff] %vm577, %v1852
        %1881 = vst.msk [vmem:[%s1875 + $0x28] sm:$0xff] %vm577, %v1854
        %1882 = vst.msk [vmem:[%s1875 + $0x30] sm:$0xff] %vm577, %v1856
        %1883 = vst.msk [vmem:[%s1875 + $0x38] sm:$0xff] %vm577, %v1858
        %1884 = vst.msk [vmem:[%s1875 + $0x40] sm:$0xff] %vm577, %v1860
        %1885 = vst.msk [vmem:[%s1875 + $0x48] sm:$0xff] %vm577, %v1862
        %1886 = vst.msk [vmem:[%s1875 + $0x50] sm:$0xff] %vm577, %v1864
        %1887 = vst.msk [vmem:[%s1875 + $0x58] sm:$0xff] %vm577, %v1866
        %1888 = vst.msk [vmem:[%s1875 + $0x60] sm:$0xff] %vm577, %v1868
        %1889 = vst.msk [vmem:[%s1875 + $0x68] sm:$0xff] %vm577, %v1870
        %1890 = vst.msk [vmem:[%s1875 + $0x70] sm:$0xff] %vm577, %v1872
        %1891 = vst.msk [vmem:[%s1875 + $0x78] sm:$0xff] %vm577, %v1874
        %s1892 = sand.u32 %s359, 1
        %s1893 = scalar_lea.sflag [#allocation3], %s1892
        %s1894 = sand.u32 %s359, 1
        %s1895 = smul.addr %s1894, 2
        %s1896 = scalar_lea.vmem [#allocation2], %s1895
        %s1897 = smul.u32 2, %s31
        %p1898 = scmp.lt.s32.totalorder %s1897, 3
        %s1899 = scalar_select %p1898, %s1897, 3
        %s1900 = smul.addr %s1899, 16
        %s1901 = smul.addr %s1900, 8
        %s1902 = scalar_lea.vmem %s16, %s1901
        // Predicated region
        $region81: #{tpu_custom_call.1} parent=79 // pred_check
          %p1903 = pneg %p369
        $region82: #{tpu_custom_call.1} parent=79 // pred_check_branch
          %1905 = sbr.rel (%p1903) target = $region84
        $region83: #{tpu_custom_call.1} parent=79 // pred_region
          %s1906 = smul.u32 2, %s31
          %s1908 = ssub.s32 32, 32
          %1909 = vsyncadd %s1893, %s1908
          %s1910 = smul.addr %s1906, 16
          %s1911 = scalar_lea.hbm %s15, %s1910
          %s1912 = sshll.u32 %s1896, 4
          %s1913 = int_to_ptr.vmem [resolvable:$true] %s1912
          %1918 = dma.vmem_to_hbm [thread:$0]  %s1913, 32, %s1911, %s1893, 16, 16, 1
        $region84: #{tpu_custom_call.1} parent=79 // pred_fallthru
          _
        // Predicated region
        $region85: #{tpu_custom_call.1} parent=79 // pred_check
          %p1919 = pneg %p395
        $region86: #{tpu_custom_call.1} parent=79 // pred_check_branch
          %1921 = sbr.rel (%p1919) target = $region88
        $region87: #{tpu_custom_call.1} parent=79 // pred_region
          %s1922 = smul.u32 2, %s31
        $region88: #{tpu_custom_call.1} parent=79 // pred_fallthru
          _
      $region80: #{tpu_custom_call.1} parent=5 // pred_fallthru
        _
      %p1923 = scmp.le.s32.totalorder 2, %s26
      // Predicated region
      $region89: #{tpu_custom_call.1} parent=5 // pred_check
        %p1924 = pneg %p1923
      $region90: #{tpu_custom_call.1} parent=5 // pred_check_branch
        %1926 = sbr.rel (%p1924) target = $region92
      $region91: #{tpu_custom_call.1} parent=5 // pred_region
        %s1927 = ssub.s32 %s26, 2
        // Predicated region
        $region93: #{tpu_custom_call.1} parent=91 // pred_check
          %p1928 = pneg %p375
        $region94: #{tpu_custom_call.1} parent=91 // pred_check_branch
          %1930 = sbr.rel (%p1928) target = $region96
        $region95: #{tpu_custom_call.1} parent=91 // pred_region
          %s1931 = sand.u32 %s360, 1
          %s1932 = scalar_lea.sflag [#allocation3], %s1931
          %s1933 = sand.u32 %s360, 1
          %s1934 = smul.addr %s1933, 2
          %s1935 = scalar_lea.vmem [#allocation2], %s1934
          %1936 = dma.done %s1932, 32
        $region96: #{tpu_custom_call.1} parent=91 // pred_fallthru
          _
        // Predicated region
        $region97: #{tpu_custom_call.1} parent=91 // pred_check
          %p1937 = pneg %p401
        $region98: #{tpu_custom_call.1} parent=91 // pred_check_branch
          %1939 = sbr.rel (%p1937) target = $region100
        $region99: #{tpu_custom_call.1} parent=91 // pred_region
          %s1940 = smul.u32 2, %s32
          %p1941 = scmp.lt.s32.totalorder %s1940, 3
          %s1942 = scalar_select %p1941, %s1940, 3
          %s1943 = smul.addr %s1942, 16
          %s1944 = smul.addr %s1943, 8
          %s1945 = scalar_lea.vmem %s16, %s1944
        $region100: #{tpu_custom_call.1} parent=91 // pred_fallthru
          _
      $region92: #{tpu_custom_call.1} parent=5 // pred_fallthru
        _
    $region6: #{tpu_custom_call.1} parent=1 // loop_footer
      %s30 = sadd.s32 1, %s26
    $region7: #{tpu_custom_call.1} parent=1 // loop_footer_branch
      %25 = sbr.rel target = $region3
    $region8: #{tpu_custom_call.1} parent=1 // loop_exit
      _
    %1946 = vsyncpa [#allocation3], 1
    %s1947 = scalar_lea.sflag [#allocation3], 1
    %1948 = vsyncpa %s1947, 1

</llo_original>
